<compile_context>
chip_gen: v7x
topology: tpu7x:2x2x1
jax: 0.10.0
libtpu: 0.0.40
codegen_flags: <defaults>
</compile_context>

<pallas_src>
import functools
import math

import jax
import jax.numpy as jnp
from jax.experimental import pallas as pl
from jax.experimental.pallas import tpu as pltpu

_MXU_DTYPE = jnp.bfloat16   # matmul operand dtype (f32 accumulation)


# ----------------------------------------------------------------------------
# Small helpers
# ----------------------------------------------------------------------------
def _round_up(v, m):
    return ((v + m - 1) // m) * m


def _im2col(x, k, stride):
    """x: (N, Hp, Wp, C) already padded.  Returns (N, Ho, Wo, k*k*C).

    Tap (dy, dx) blocks are laid out row-major along the last axis, each block
    holding the C input channels — this matches w.transpose(2,3,1,0).reshape(
    k*k*C, Cout) for a PyTorch (Cout, C, k, k) weight.
    """
    N, Hp, Wp, C = x.shape
    Ho = (Hp - k) // stride + 1
    Wo = (Wp - k) // stride + 1
    taps = []
    for dy in range(k):
        for dx in range(k):
            taps.append(x[:, dy:dy + stride * Ho:stride,
                          dx:dx + stride * Wo:stride, :])
    return jnp.concatenate(taps, axis=-1)


def _prep_rows(x2d, tm_target=512):
    """Pad rows of (M, K) up to a multiple of the chosen tile size."""
    M = x2d.shape[0]
    tm = min(tm_target, _round_up(M, 8))
    Mp = _round_up(M, tm)
    if Mp != M:
        x2d = jnp.pad(x2d, ((0, Mp - M), (0, 0)))
    return x2d, M, Mp, tm


# ----------------------------------------------------------------------------
# Pallas kernels
# ----------------------------------------------------------------------------
def _mm_bn_relu_kernel(x_ref, w_ref, s_ref, b_ref, o_ref):
    """One fused matmul (im2col conv) + folded-BN scale/bias + ReLU."""
    y = jnp.dot(x_ref[...], w_ref[...], preferred_element_type=jnp.float32)
    o_ref[...] = jnp.maximum(y * s_ref[...] + b_ref[...], 0.0)


def _stem2a_pool_kernel(cm, p_ref, w_ref, s_ref, b_ref, conv_ref, pool_ref):
    """Fused stem2a (2x2 conv + BN + ReLU) and 2x2/stride-1 max-pool.

    p_ref: (tm, 4*cm) im2col patches of the padded stem1 output (f32).
    Both outputs are computed from the same patch tile (one HBM read).
    """
    p = p_ref[...]
    y = jnp.dot(p.astype(_MXU_DTYPE), w_ref[...],
                preferred_element_type=jnp.float32)
    conv_ref[...] = jnp.maximum(y * s_ref[...] + b_ref[...], 0.0)
    # MaxPool2d(k=2, s=1) == max over the 4 tap groups of the patch matrix.
    m01 = jnp.maximum(p[:, 0 * cm:1 * cm], p[:, 1 * cm:2 * cm])
    m23 = jnp.maximum(p[:, 2 * cm:3 * cm], p[:, 3 * cm:4 * cm])
    pool_ref[...] = jnp.maximum(m01, m23)


def _stem34_kernel(p1_ref, p2_ref, w3a_ref, w3b_ref, s3_ref, b3_ref,
                   w4_ref, s4_ref, b4_ref, o_ref):
    """Fused stem3 (3x3 s2 conv on concat via K-split) + stem4 (1x1 conv).

    p1_ref: (tm, 9*cm) im2col patches of the pooled branch  (x1 channels)
    p2_ref: (tm, 9*cm) im2col patches of the stem2b branch  (x2 channels)
    """
    y = jnp.dot(p1_ref[...], w3a_ref[...], preferred_element_type=jnp.float32)
    y = y + jnp.dot(p2_ref[...], w3b_ref[...],
                    preferred_element_type=jnp.float32)
    y = jnp.maximum(y * s3_ref[...] + b3_ref[...], 0.0)          # stem3 out
    z = jnp.dot(y.astype(_MXU_DTYPE), w4_ref[...],
                preferred_element_type=jnp.float32)
    o_ref[...] = jnp.maximum(z * s4_ref[...] + b4_ref[...], 0.0)  # stem4 out


# ----------------------------------------------------------------------------
# pallas_call wrappers
# ----------------------------------------------------------------------------
def conv_mm_bn_relu(x2d, w, scale, bias, tm_target=512):
    """x2d: (M, K) im2col patches, w: (K, Cout).  Returns (M, Cout) f32."""
    x2d, M0, Mp, tm = _prep_rows(x2d, tm_target)
    K = x2d.shape[1]
    Cout = w.shape[1]
    out = pl.pallas_call(
        _mm_bn_relu_kernel,
        out_shape=jax.ShapeDtypeStruct((Mp, Cout), jnp.float32),
        grid=(Mp // tm,),
        in_specs=[
            pl.BlockSpec((tm, K), lambda i: (i, 0)),
            pl.BlockSpec((K, Cout), lambda i: (0, 0)),
            pl.BlockSpec((1, Cout), lambda i: (0, 0)),
            pl.BlockSpec((1, Cout), lambda i: (0, 0)),
        ],
        out_specs=pl.BlockSpec((tm, Cout), lambda i: (i, 0)),
        compiler_params=pltpu.CompilerParams(
            dimension_semantics=("parallel",)),
    )(x2d.astype(_MXU_DTYPE), w.astype(_MXU_DTYPE),
      scale.reshape(1, Cout).astype(jnp.float32),
      bias.reshape(1, Cout).astype(jnp.float32))
    return out[:M0]


def stem2a_and_pool(p2d, w, scale, bias, cm, tm_target=512):
    """p2d: (M, 4*cm) f32 patches of padded stem1 output.

    Returns (conv_out (M, cm//2), pool_out (M, cm)), both f32.
    """
    p2d, M0, Mp, tm = _prep_rows(p2d, tm_target)
    K = p2d.shape[1]
    Ca = w.shape[1]          # cm // 2
    conv_out, pool_out = pl.pallas_call(
        functools.partial(_stem2a_pool_kernel, cm),
        out_shape=(jax.ShapeDtypeStruct((Mp, Ca), jnp.float32),
                   jax.ShapeDtypeStruct((Mp, cm), jnp.float32)),
        grid=(Mp // tm,),
        in_specs=[
            pl.BlockSpec((tm, K), lambda i: (i, 0)),
            pl.BlockSpec((K, Ca), lambda i: (0, 0)),
            pl.BlockSpec((1, Ca), lambda i: (0, 0)),
            pl.BlockSpec((1, Ca), lambda i: (0, 0)),
        ],
        out_specs=[
            pl.BlockSpec((tm, Ca), lambda i: (i, 0)),
            pl.BlockSpec((tm, cm), lambda i: (i, 0)),
        ],
        compiler_params=pltpu.CompilerParams(
            dimension_semantics=("parallel",)),
    )(p2d.astype(jnp.float32), w.astype(_MXU_DTYPE),
      scale.reshape(1, Ca).astype(jnp.float32),
      bias.reshape(1, Ca).astype(jnp.float32))
    return conv_out[:M0], pool_out[:M0]


def stem34_fused(p1, p2, w3a, w3b, s3, b3, w4, s4, b4, tm_target=512):
    """p1, p2: (M, 9*cm) patches of the two branches.  Returns (M, c2) f32."""
    M = p1.shape[0]
    p1, M0, Mp, tm = _prep_rows(p1, tm_target)
    p2, _, _, _ = _prep_rows(p2, tm_target)
    K = p1.shape[1]
    cm = w3a.shape[1]
    c2 = w4.shape[1]
    out = pl.pallas_call(
        _stem34_kernel,
        out_shape=jax.ShapeDtypeStruct((Mp, c2), jnp.float32),
        grid=(Mp // tm,),
        in_specs=[
            pl.BlockSpec((tm, K), lambda i: (i, 0)),
            pl.BlockSpec((tm, K), lambda i: (i, 0)),
            pl.BlockSpec((K, cm), lambda i: (0, 0)),
            pl.BlockSpec((K, cm), lambda i: (0, 0)),
            pl.BlockSpec((1, cm), lambda i: (0, 0)),
            pl.BlockSpec((1, cm), lambda i: (0, 0)),
            pl.BlockSpec((cm, c2), lambda i: (0, 0)),
            pl.BlockSpec((1, c2), lambda i: (0, 0)),
            pl.BlockSpec((1, c2), lambda i: (0, 0)),
        ],
        out_specs=pl.BlockSpec((tm, c2), lambda i: (i, 0)),
        compiler_params=pltpu.CompilerParams(
            dimension_semantics=("parallel",)),
    )(p1.astype(_MXU_DTYPE), p2.astype(_MXU_DTYPE),
      w3a.astype(_MXU_DTYPE), w3b.astype(_MXU_DTYPE),
      s3.reshape(1, cm).astype(jnp.float32),
      b3.reshape(1, cm).astype(jnp.float32),
      w4.astype(_MXU_DTYPE),
      s4.reshape(1, c2).astype(jnp.float32),
      b4.reshape(1, c2).astype(jnp.float32))
    del M
    return out[:M0]


# ----------------------------------------------------------------------------
# Parameter construction (deterministic, synthetic; BN folded for inference)
# ----------------------------------------------------------------------------
def _fold_bn(gamma, beta, mean, var, eps=1e-3):
    scale = gamma / jnp.sqrt(var + eps)
    return scale, beta - mean * scale


class _KeyGen:
    def __init__(self, key):
        self.key = key

    def __call__(self):
        self.key, sub = jax.random.split(self.key)
        return sub


def make_params(c1, cm, c2, seed=0):
    kg = _KeyGen(jax.random.PRNGKey(seed))

    def conv_w(cout, cin, k, flat=True):
        # PyTorch layout (Cout, Cin, k, k) → im2col layout (k*k*Cin, Cout).
        w = jax.random.normal(kg(), (cout, cin, k, k), jnp.float32)
        w = w * (1.0 / math.sqrt(cin * k * k))
        w = jnp.transpose(w, (2, 3, 1, 0))                 # (k, k, Cin, Cout)
        return w.reshape(k * k * cin, cout) if flat else w

    def bn(c):
        gamma = jax.random.uniform(kg(), (c,), jnp.float32, 0.5, 1.5)
        beta = jax.random.normal(kg(), (c,), jnp.float32) * 0.1
        mean = jax.random.normal(kg(), (c,), jnp.float32) * 0.1
        var = jax.random.uniform(kg(), (c,), jnp.float32, 0.5, 1.5)
        return _fold_bn(gamma, beta, mean, var, eps=1e-3)  # ultralytics Conv BN

    p = {}
    p["w1"] = conv_w(cm, c1, 3)                 # stem1: 3x3 s2 p1
    p["s1"], p["b1"] = bn(cm)
    p["w2a"] = conv_w(cm // 2, cm, 2)           # stem2a: 2x2 s1 p0
    p["s2a"], p["b2a"] = bn(cm // 2)
    p["w2b"] = conv_w(cm, cm // 2, 2)           # stem2b: 2x2 s1 p0
    p["s2b"], p["b2b"] = bn(cm)
    p["w3"] = conv_w(cm, 2 * cm, 3, flat=False)  # stem3: 3x3 s2 p1, (3,3,2cm,cm)
    p["s3"], p["b3"] = bn(cm)
    p["w4"] = conv_w(c2, cm, 1)                 # stem4: 1x1
    p["s4"], p["b4"] = bn(c2)
    return p


# ----------------------------------------------------------------------------
# Forward pass (Pallas) — matches HGStem.forward semantics (inference BN, ReLU)
# ----------------------------------------------------------------------------
def hgstem_forward(x_nchw, params):
    x = jnp.transpose(x_nchw, (0, 2, 3, 1)).astype(jnp.float32)   # NHWC
    N = x.shape[0]
    cm = params["w1"].shape[1]
    c2 = params["w4"].shape[1]

    # stem1: 3x3, stride 2, pad 1  (im2col → one fused matmul+BN+ReLU kernel)
    p1 = _im2col(jnp.pad(x, ((0, 0), (1, 1), (1, 1), (0, 0))), 3, 2)
    _, H1, W1, K1 = p1.shape
    y1 = conv_mm_bn_relu(p1.reshape(-1, K1), params["w1"],
                         params["s1"], params["b1"]).reshape(N, H1, W1, cm)

    # F.pad(x, [0, 1, 0, 1]) — pad right and bottom by 1
    xp = jnp.pad(y1, ((0, 0), (0, 1), (0, 1), (0, 0)))

    # stem2a (2x2 conv) and MaxPool2d(2, stride=1, ceil_mode) fused: both read
    # the same im2col patches of xp, so xp is pulled through HBM once.
    q = _im2col(xp, 2, 1).reshape(-1, 4 * cm)
    conv2a, pool1 = stem2a_and_pool(q, params["w2a"], params["s2a"],
                                    params["b2a"], cm)
    x2 = conv2a.reshape(N, H1, W1, cm // 2)
    x1 = pool1.reshape(N, H1, W1, cm)

    # F.pad(x2, [0, 1, 0, 1]) then stem2b: 2x2 conv, stride 1, pad 0
    x2p = jnp.pad(x2, ((0, 0), (0, 1), (0, 1), (0, 0)))
    q2 = _im2col(x2p, 2, 1)
    x2 = conv_mm_bn_relu(q2.reshape(-1, q2.shape[-1]), params["w2b"],
                         params["s2b"], params["b2b"]).reshape(N, H1, W1, cm)

    # stem3 (3x3 s2 p1 on cat([x1, x2], C)) + stem4 (1x1), fused in one kernel.
    # The channel concat is replaced by a K-split of the stem3 weight.
    r1 = _im2col(jnp.pad(x1, ((0, 0), (1, 1), (1, 1), (0, 0))), 3, 2)
    r2 = _im2col(jnp.pad(x2, ((0, 0), (1, 1), (1, 1), (0, 0))), 3, 2)
    _, H2, W2, K3 = r1.shape
    w3 = params["w3"]                                     # (3, 3, 2*cm, cm)
    w3a = w3[:, :, :cm, :].reshape(9 * cm, cm)            # x1 channels
    w3b = w3[:, :, cm:, :].reshape(9 * cm, cm)            # x2 channels
    out = stem34_fused(r1.reshape(-1, K3), r2.reshape(-1, K3),
                       w3a, w3b, params["s3"], params["b3"],
                       params["w4"], params["s4"], params["b4"])
    out = out.reshape(N, H2, W2, c2)
    return jnp.transpose(out, (0, 3, 1, 2))               # back to NCHW


# ----------------------------------------------------------------------------
# Pure-JAX reference (same math & dtype policy, no Pallas) for validation
# ----------------------------------------------------------------------------
def hgstem_reference(x_nchw, params):
    x = jnp.transpose(x_nchw, (0, 2, 3, 1)).astype(jnp.float32)
    N = x.shape[0]
    cm = params["w1"].shape[1]

    def conv(v, w2d, s, b, k, stride, pad):
        if pad:
            v = jnp.pad(v, ((0, 0), (pad, pad), (pad, pad), (0, 0)))
        q = _im2col(v, k, stride)
        y = jnp.einsum("nhwk,kc->nhwc", q.astype(_MXU_DTYPE),
                       w2d.astype(_MXU_DTYPE),
                       preferred_element_type=jnp.float32)
        return jnp.maximum(y * s + b, 0.0)

    y1 = conv(x, params["w1"], params["s1"], params["b1"], 3, 2, 1)
    xp = jnp.pad(y1, ((0, 0), (0, 1), (0, 1), (0, 0)))
    x2 = conv(xp, params["w2a"], params["s2a"], params["b2a"], 2, 1, 0)
    x2p = jnp.pad(x2, ((0, 0), (0, 1), (0, 1), (0, 0)))
    x2 = conv(x2p, params["w2b"], params["s2b"], params["b2b"], 2, 1, 0)
    H1, W1 = y1.shape[1], y1.shape[2]
    q = _im2col(xp, 2, 1).reshape(N, H1, W1, 4, cm)
    x1 = jnp.max(q, axis=3)                               # MaxPool2d(2, s=1)
    cat = jnp.concatenate([x1, x2], axis=-1)
    w3 = params["w3"].reshape(9 * 2 * cm, cm)
    y3 = conv(cat, w3, params["s3"], params["b3"], 3, 2, 1)
    out = conv(y3, params["w4"], params["s4"], params["b4"], 1, 1, 0)
    return jnp.transpose(out, (0, 3, 1, 2))


# ----------------------------------------------------------------------------
if __name__ == "__main__":
    N, c1, H, W = 2, 3, 16, 16
    cm, c2 = 16, 32

    key = jax.random.PRNGKey(0)
    x = jax.random.normal(key, (N, c1, H, W), jnp.float32)   # NCHW like PyTorch
    params = make_params(c1, cm, c2, seed=0)

    out = jax.jit(hgstem_forward)(x, params)
    out = jax.block_until_ready(out)

    ref = hgstem_reference(x, params)
    assert out.shape == (N, c2, H // 4, W // 4), out.shape
    max_err = float(jnp.max(jnp.abs(out - ref)))
    # bf16 MXU operands (f32 accumulation) in both kernel and reference; the
    # tolerance covers accumulation-order differences only.
    assert jnp.allclose(out, ref, atol=2e-2, rtol=2e-2), max_err

    print("KERNEL_OK")
</pallas_src>

<mosaic_0001>
module attributes {stable_mosaic.version = 11 : i64} {
  func.func @_stem2a_pool_kernel(%arg0: i32, %arg1: memref<128x64xf32, #tpu.memory_space<vmem>>, %arg2: memref<64x8xbf16, #tpu.memory_space<vmem>>, %arg3: memref<1x8xf32, #tpu.memory_space<vmem>>, %arg4: memref<1x8xf32, #tpu.memory_space<vmem>>, %arg5: memref<128x8xf32, #tpu.memory_space<vmem>>, %arg6: memref<128x16xf32, #tpu.memory_space<vmem>>) attributes {dimension_semantics = [#tpu.dimension_semantics<parallel>], iteration_bounds = array<i64: 1>, scalar_prefetch = 0 : i64, scratch_operands = 0 : i64, tpu.core_type = #tpu.core_type<tc>, window_params = [{transform_indices = @transform_0, window_bounds = array<i64: 128, 64>}, {pipeline_mode = #tpu.pipeline_mode<synchronous>, transform_indices = @transform_1, window_bounds = array<i64: 64, 8>}, {pipeline_mode = #tpu.pipeline_mode<synchronous>, transform_indices = @transform_2, window_bounds = array<i64: 1, 8>}, {pipeline_mode = #tpu.pipeline_mode<synchronous>, transform_indices = @transform_3, window_bounds = array<i64: 1, 8>}, {transform_indices = @transform_4, window_bounds = array<i64: 128, 8>}, {transform_indices = @transform_5, window_bounds = array<i64: 128, 16>}]} {
    %c0 = arith.constant 0 : index
    %c0_0 = arith.constant 0 : index
    %0 = vector.load %arg1[%c0, %c0_0] : memref<128x64xf32, #tpu.memory_space<vmem>>, vector<128x64xf32>
    %1 = arith.truncf %0 : vector<128x64xf32> to vector<128x64xbf16>
    %c0_1 = arith.constant 0 : index
    %c0_2 = arith.constant 0 : index
    %2 = vector.load %arg2[%c0_1, %c0_2] : memref<64x8xbf16, #tpu.memory_space<vmem>>, vector<64x8xbf16>
    %cst = arith.constant dense<0.000000e+00> : vector<128x8xf32>
    %3 = tpu.matmul %1, %2, %cst {dimension_numbers = #tpu.dot_dimension_numbers<[1], [0], [0], [1], [0, 0, 1, 1], [], []>} : vector<128x64xbf16>, vector<64x8xbf16>, vector<128x8xf32> -> vector<128x8xf32>
    %c0_3 = arith.constant 0 : index
    %c0_4 = arith.constant 0 : index
    %4 = vector.load %arg3[%c0_3, %c0_4] : memref<1x8xf32, #tpu.memory_space<vmem>>, vector<1x8xf32>
    %5 = vector.broadcast %4 : vector<1x8xf32> to vector<128x8xf32>
    %6 = arith.mulf %3, %5 : vector<128x8xf32>
    %c0_5 = arith.constant 0 : index
    %c0_6 = arith.constant 0 : index
    %7 = vector.load %arg4[%c0_5, %c0_6] : memref<1x8xf32, #tpu.memory_space<vmem>>, vector<1x8xf32>
    %8 = vector.broadcast %7 : vector<1x8xf32> to vector<128x8xf32>
    %9 = arith.addf %6, %8 : vector<128x8xf32>
    %cst_7 = arith.constant 0.000000e+00 : f32
    %10 = vector.broadcast %cst_7 : f32 to vector<128x8xf32>
    %11 = arith.maximumf %9, %10 : vector<128x8xf32>
    %c0_8 = arith.constant 0 : index
    %c0_9 = arith.constant 0 : index
    %12 = vector.load %arg5[%c0_8, %c0_9] : memref<128x8xf32, #tpu.memory_space<vmem>>, vector<128x8xf32>
    tpu.vector_store %arg5[%c0_8, %c0_9], %11 {strides = array<i32>} : memref<128x8xf32, #tpu.memory_space<vmem>>, vector<128x8xf32>,
    %13 = vector.extract_strided_slice %0 {offsets = [0, 0], sizes = [128, 16], strides = [1, 1]} : vector<128x64xf32> to vector<128x16xf32>
    %14 = vector.extract_strided_slice %0 {offsets = [0, 16], sizes = [128, 16], strides = [1, 1]} : vector<128x64xf32> to vector<128x16xf32>
    %15 = arith.maximumf %13, %14 : vector<128x16xf32>
    %16 = vector.extract_strided_slice %0 {offsets = [0, 32], sizes = [128, 16], strides = [1, 1]} : vector<128x64xf32> to vector<128x16xf32>
    %17 = vector.extract_strided_slice %0 {offsets = [0, 48], sizes = [128, 16], strides = [1, 1]} : vector<128x64xf32> to vector<128x16xf32>
    %18 = arith.maximumf %16, %17 : vector<128x16xf32>
    %19 = arith.maximumf %15, %18 : vector<128x16xf32>
    %c0_10 = arith.constant 0 : index
    %c0_11 = arith.constant 0 : index
    %20 = vector.load %arg6[%c0_10, %c0_11] : memref<128x16xf32, #tpu.memory_space<vmem>>, vector<128x16xf32>
    tpu.vector_store %arg6[%c0_10, %c0_11], %19 {strides = array<i32>} : memref<128x16xf32, #tpu.memory_space<vmem>>, vector<128x16xf32>,
    return
  }
  func.func @transform_0(%arg0: i32) -> (i32, i32) {
    %c0_i32 = arith.constant 0 : i32
    %c0_i32_0 = arith.constant 0 : i32
    return %arg0, %c0_i32 : i32, i32
  }
  func.func @transform_1(%arg0: i32) -> (i32, i32) {
    %c0_i32 = arith.constant 0 : i32
    %c0_i32_0 = arith.constant 0 : i32
    %c0_i32_1 = arith.constant 0 : i32
    return %c0_i32, %c0_i32_0 : i32, i32
  }
  func.func @transform_2(%arg0: i32) -> (i32, i32) {
    %c0_i32 = arith.constant 0 : i32
    %c0_i32_0 = arith.constant 0 : i32
    %c0_i32_1 = arith.constant 0 : i32
    return %c0_i32, %c0_i32_0 : i32, i32
  }
  func.func @transform_3(%arg0: i32) -> (i32, i32) {
    %c0_i32 = arith.constant 0 : i32
    %c0_i32_0 = arith.constant 0 : i32
    %c0_i32_1 = arith.constant 0 : i32
    return %c0_i32, %c0_i32_0 : i32, i32
  }
  func.func @transform_4(%arg0: i32) -> (i32, i32) {
    %c0_i32 = arith.constant 0 : i32
    %c0_i32_0 = arith.constant 0 : i32
    return %arg0, %c0_i32 : i32, i32
  }
  func.func @transform_5(%arg0: i32) -> (i32, i32) {
    %c0_i32 = arith.constant 0 : i32
    %c0_i32_0 = arith.constant 0 : i32
    return %arg0, %c0_i32 : i32, i32
  }
}

module attributes {stable_mosaic.version = 11 : i64} {
  func.func @_mm_bn_relu_kernel(%arg0: i32, %arg1: memref<128x27xbf16, #tpu.memory_space<vmem>>, %arg2: memref<27x16xbf16, #tpu.memory_space<vmem>>, %arg3: memref<1x16xf32, #tpu.memory_space<vmem>>, %arg4: memref<1x16xf32, #tpu.memory_space<vmem>>, %arg5: memref<128x16xf32, #tpu.memory_space<vmem>>) attributes {dimension_semantics = [#tpu.dimension_semantics<parallel>], iteration_bounds = array<i64: 1>, scalar_prefetch = 0 : i64, scratch_operands = 0 : i64, tpu.core_type = #tpu.core_type<tc>, window_params = [{transform_indices = @transform_0, window_bounds = array<i64: 128, 27>}, {pipeline_mode = #tpu.pipeline_mode<synchronous>, transform_indices = @transform_1, window_bounds = array<i64: 27, 16>}, {pipeline_mode = #tpu.pipeline_mode<synchronous>, transform_indices = @transform_2, window_bounds = array<i64: 1, 16>}, {pipeline_mode = #tpu.pipeline_mode<synchronous>, transform_indices = @transform_3, window_bounds = array<i64: 1, 16>}, {transform_indices = @transform_4, window_bounds = array<i64: 128, 16>}]} {
    %c0 = arith.constant 0 : index
    %c0_0 = arith.constant 0 : index
    %0 = vector.load %arg1[%c0, %c0_0] : memref<128x27xbf16, #tpu.memory_space<vmem>>, vector<128x27xbf16>
    %c0_1 = arith.constant 0 : index
    %c0_2 = arith.constant 0 : index
    %1 = vector.load %arg2[%c0_1, %c0_2] : memref<27x16xbf16, #tpu.memory_space<vmem>>, vector<27x16xbf16>
    %cst = arith.constant dense<0.000000e+00> : vector<128x16xf32>
    %2 = tpu.matmul %0, %1, %cst {dimension_numbers = #tpu.dot_dimension_numbers<[1], [0], [0], [1], [0, 0, 1, 1], [], []>} : vector<128x27xbf16>, vector<27x16xbf16>, vector<128x16xf32> -> vector<128x16xf32>
    %c0_3 = arith.constant 0 : index
    %c0_4 = arith.constant 0 : index
    %3 = vector.load %arg3[%c0_3, %c0_4] : memref<1x16xf32, #tpu.memory_space<vmem>>, vector<1x16xf32>
    %4 = vector.broadcast %3 : vector<1x16xf32> to vector<128x16xf32>
    %5 = arith.mulf %2, %4 : vector<128x16xf32>
    %c0_5 = arith.constant 0 : index
    %c0_6 = arith.constant 0 : index
    %6 = vector.load %arg4[%c0_5, %c0_6] : memref<1x16xf32, #tpu.memory_space<vmem>>, vector<1x16xf32>
    %7 = vector.broadcast %6 : vector<1x16xf32> to vector<128x16xf32>
    %8 = arith.addf %5, %7 : vector<128x16xf32>
    %cst_7 = arith.constant 0.000000e+00 : f32
    %9 = vector.broadcast %cst_7 : f32 to vector<128x16xf32>
    %10 = arith.maximumf %8, %9 : vector<128x16xf32>
    %c0_8 = arith.constant 0 : index
    %c0_9 = arith.constant 0 : index
    %11 = vector.load %arg5[%c0_8, %c0_9] : memref<128x16xf32, #tpu.memory_space<vmem>>, vector<128x16xf32>
    tpu.vector_store %arg5[%c0_8, %c0_9], %10 {strides = array<i32>} : memref<128x16xf32, #tpu.memory_space<vmem>>, vector<128x16xf32>,
    return
  }
  func.func @transform_0(%arg0: i32) -> (i32, i32) {
    %c0_i32 = arith.constant 0 : i32
    %c0_i32_0 = arith.constant 0 : i32
    return %arg0, %c0_i32 : i32, i32
  }
  func.func @transform_1(%arg0: i32) -> (i32, i32) {
    %c0_i32 = arith.constant 0 : i32
    %c0_i32_0 = arith.constant 0 : i32
    %c0_i32_1 = arith.constant 0 : i32
    return %c0_i32, %c0_i32_0 : i32, i32
  }
  func.func @transform_2(%arg0: i32) -> (i32, i32) {
    %c0_i32 = arith.constant 0 : i32
    %c0_i32_0 = arith.constant 0 : i32
    %c0_i32_1 = arith.constant 0 : i32
    return %c0_i32, %c0_i32_0 : i32, i32
  }
  func.func @transform_3(%arg0: i32) -> (i32, i32) {
    %c0_i32 = arith.constant 0 : i32
    %c0_i32_0 = arith.constant 0 : i32
    %c0_i32_1 = arith.constant 0 : i32
    return %c0_i32, %c0_i32_0 : i32, i32
  }
  func.func @transform_4(%arg0: i32) -> (i32, i32) {
    %c0_i32 = arith.constant 0 : i32
    %c0_i32_0 = arith.constant 0 : i32
    return %arg0, %c0_i32 : i32, i32
  }
}

module attributes {stable_mosaic.version = 11 : i64} {
  func.func @_mm_bn_relu_kernel(%arg0: i32, %arg1: memref<128x32xbf16, #tpu.memory_space<vmem>>, %arg2: memref<32x16xbf16, #tpu.memory_space<vmem>>, %arg3: memref<1x16xf32, #tpu.memory_space<vmem>>, %arg4: memref<1x16xf32, #tpu.memory_space<vmem>>, %arg5: memref<128x16xf32, #tpu.memory_space<vmem>>) attributes {dimension_semantics = [#tpu.dimension_semantics<parallel>], iteration_bounds = array<i64: 1>, scalar_prefetch = 0 : i64, scratch_operands = 0 : i64, tpu.core_type = #tpu.core_type<tc>, window_params = [{transform_indices = @transform_0, window_bounds = array<i64: 128, 32>}, {pipeline_mode = #tpu.pipeline_mode<synchronous>, transform_indices = @transform_1, window_bounds = array<i64: 32, 16>}, {pipeline_mode = #tpu.pipeline_mode<synchronous>, transform_indices = @transform_2, window_bounds = array<i64: 1, 16>}, {pipeline_mode = #tpu.pipeline_mode<synchronous>, transform_indices = @transform_3, window_bounds = array<i64: 1, 16>}, {transform_indices = @transform_4, window_bounds = array<i64: 128, 16>}]} {
    %c0 = arith.constant 0 : index
    %c0_0 = arith.constant 0 : index
    %0 = vector.load %arg1[%c0, %c0_0] : memref<128x32xbf16, #tpu.memory_space<vmem>>, vector<128x32xbf16>
    %c0_1 = arith.constant 0 : index
    %c0_2 = arith.constant 0 : index
    %1 = vector.load %arg2[%c0_1, %c0_2] : memref<32x16xbf16, #tpu.memory_space<vmem>>, vector<32x16xbf16>
    %cst = arith.constant dense<0.000000e+00> : vector<128x16xf32>
    %2 = tpu.matmul %0, %1, %cst {dimension_numbers = #tpu.dot_dimension_numbers<[1], [0], [0], [1], [0, 0, 1, 1], [], []>} : vector<128x32xbf16>, vector<32x16xbf16>, vector<128x16xf32> -> vector<128x16xf32>
    %c0_3 = arith.constant 0 : index
    %c0_4 = arith.constant 0 : index
    %3 = vector.load %arg3[%c0_3, %c0_4] : memref<1x16xf32, #tpu.memory_space<vmem>>, vector<1x16xf32>
    %4 = vector.broadcast %3 : vector<1x16xf32> to vector<128x16xf32>
    %5 = arith.mulf %2, %4 : vector<128x16xf32>
    %c0_5 = arith.constant 0 : index
    %c0_6 = arith.constant 0 : index
    %6 = vector.load %arg4[%c0_5, %c0_6] : memref<1x16xf32, #tpu.memory_space<vmem>>, vector<1x16xf32>
    %7 = vector.broadcast %6 : vector<1x16xf32> to vector<128x16xf32>
    %8 = arith.addf %5, %7 : vector<128x16xf32>
    %cst_7 = arith.constant 0.000000e+00 : f32
    %9 = vector.broadcast %cst_7 : f32 to vector<128x16xf32>
    %10 = arith.maximumf %8, %9 : vector<128x16xf32>
    %c0_8 = arith.constant 0 : index
    %c0_9 = arith.constant 0 : index
    %11 = vector.load %arg5[%c0_8, %c0_9] : memref<128x16xf32, #tpu.memory_space<vmem>>, vector<128x16xf32>
    tpu.vector_store %arg5[%c0_8, %c0_9], %10 {strides = array<i32>} : memref<128x16xf32, #tpu.memory_space<vmem>>, vector<128x16xf32>,
    return
  }
  func.func @transform_0(%arg0: i32) -> (i32, i32) {
    %c0_i32 = arith.constant 0 : i32
    %c0_i32_0 = arith.constant 0 : i32
    return %arg0, %c0_i32 : i32, i32
  }
  func.func @transform_1(%arg0: i32) -> (i32, i32) {
    %c0_i32 = arith.constant 0 : i32
    %c0_i32_0 = arith.constant 0 : i32
    %c0_i32_1 = arith.constant 0 : i32
    return %c0_i32, %c0_i32_0 : i32, i32
  }
  func.func @transform_2(%arg0: i32) -> (i32, i32) {
    %c0_i32 = arith.constant 0 : i32
    %c0_i32_0 = arith.constant 0 : i32
    %c0_i32_1 = arith.constant 0 : i32
    return %c0_i32, %c0_i32_0 : i32, i32
  }
  func.func @transform_3(%arg0: i32) -> (i32, i32) {
    %c0_i32 = arith.constant 0 : i32
    %c0_i32_0 = arith.constant 0 : i32
    %c0_i32_1 = arith.constant 0 : i32
    return %c0_i32, %c0_i32_0 : i32, i32
  }
  func.func @transform_4(%arg0: i32) -> (i32, i32) {
    %c0_i32 = arith.constant 0 : i32
    %c0_i32_0 = arith.constant 0 : i32
    return %arg0, %c0_i32 : i32, i32
  }
}

module attributes {stable_mosaic.version = 11 : i64} {
  func.func @_stem34_kernel(%arg0: i32, %arg1: memref<32x144xbf16, #tpu.memory_space<vmem>>, %arg2: memref<32x144xbf16, #tpu.memory_space<vmem>>, %arg3: memref<144x16xbf16, #tpu.memory_space<vmem>>, %arg4: memref<144x16xbf16, #tpu.memory_space<vmem>>, %arg5: memref<1x16xf32, #tpu.memory_space<vmem>>, %arg6: memref<1x16xf32, #tpu.memory_space<vmem>>, %arg7: memref<16x32xbf16, #tpu.memory_space<vmem>>, %arg8: memref<1x32xf32, #tpu.memory_space<vmem>>, %arg9: memref<1x32xf32, #tpu.memory_space<vmem>>, %arg10: memref<32x32xf32, #tpu.memory_space<vmem>>) attributes {dimension_semantics = [#tpu.dimension_semantics<parallel>], iteration_bounds = array<i64: 1>, scalar_prefetch = 0 : i64, scratch_operands = 0 : i64, tpu.core_type = #tpu.core_type<tc>, window_params = [{transform_indices = @transform_0, window_bounds = array<i64: 32, 144>}, {transform_indices = @transform_1, window_bounds = array<i64: 32, 144>}, {pipeline_mode = #tpu.pipeline_mode<synchronous>, transform_indices = @transform_2, window_bounds = array<i64: 144, 16>}, {pipeline_mode = #tpu.pipeline_mode<synchronous>, transform_indices = @transform_3, window_bounds = array<i64: 144, 16>}, {pipeline_mode = #tpu.pipeline_mode<synchronous>, transform_indices = @transform_4, window_bounds = array<i64: 1, 16>}, {pipeline_mode = #tpu.pipeline_mode<synchronous>, transform_indices = @transform_5, window_bounds = array<i64: 1, 16>}, {pipeline_mode = #tpu.pipeline_mode<synchronous>, transform_indices = @transform_6, window_bounds = array<i64: 16, 32>}, {pipeline_mode = #tpu.pipeline_mode<synchronous>, transform_indices = @transform_7, window_bounds = array<i64: 1, 32>}, {pipeline_mode = #tpu.pipeline_mode<synchronous>, transform_indices = @transform_8, window_bounds = array<i64: 1, 32>}, {transform_indices = @transform_9, window_bounds = array<i64: 32, 32>}]} {
    %c0 = arith.constant 0 : index
    %c0_0 = arith.constant 0 : index
    %0 = vector.load %arg1[%c0, %c0_0] : memref<32x144xbf16, #tpu.memory_space<vmem>>, vector<32x144xbf16>
    %c0_1 = arith.constant 0 : index
    %c0_2 = arith.constant 0 : index
    %1 = vector.load %arg3[%c0_1, %c0_2] : memref<144x16xbf16, #tpu.memory_space<vmem>>, vector<144x16xbf16>
    %cst = arith.constant dense<0.000000e+00> : vector<32x16xf32>
    %2 = tpu.matmul %0, %1, %cst {dimension_numbers = #tpu.dot_dimension_numbers<[1], [0], [0], [1], [0, 0, 1, 1], [], []>} : vector<32x144xbf16>, vector<144x16xbf16>, vector<32x16xf32> -> vector<32x16xf32>
    %c0_3 = arith.constant 0 : index
    %c0_4 = arith.constant 0 : index
    %3 = vector.load %arg2[%c0_3, %c0_4] : memref<32x144xbf16, #tpu.memory_space<vmem>>, vector<32x144xbf16>
    %c0_5 = arith.constant 0 : index
    %c0_6 = arith.constant 0 : index
    %4 = vector.load %arg4[%c0_5, %c0_6] : memref<144x16xbf16, #tpu.memory_space<vmem>>, vector<144x16xbf16>
    %cst_7 = arith.constant dense<0.000000e+00> : vector<32x16xf32>
    %5 = tpu.matmul %3, %4, %cst_7 {dimension_numbers = #tpu.dot_dimension_numbers<[1], [0], [0], [1], [0, 0, 1, 1], [], []>} : vector<32x144xbf16>, vector<144x16xbf16>, vector<32x16xf32> -> vector<32x16xf32>
    %6 = arith.addf %2, %5 : vector<32x16xf32>
    %c0_8 = arith.constant 0 : index
    %c0_9 = arith.constant 0 : index
    %7 = vector.load %arg5[%c0_8, %c0_9] : memref<1x16xf32, #tpu.memory_space<vmem>>, vector<1x16xf32>
    %8 = vector.broadcast %7 : vector<1x16xf32> to vector<32x16xf32>
    %9 = arith.mulf %6, %8 : vector<32x16xf32>
    %c0_10 = arith.constant 0 : index
    %c0_11 = arith.constant 0 : index
    %10 = vector.load %arg6[%c0_10, %c0_11] : memref<1x16xf32, #tpu.memory_space<vmem>>, vector<1x16xf32>
    %11 = vector.broadcast %10 : vector<1x16xf32> to vector<32x16xf32>
    %12 = arith.addf %9, %11 : vector<32x16xf32>
    %cst_12 = arith.constant 0.000000e+00 : f32
    %13 = vector.broadcast %cst_12 : f32 to vector<32x16xf32>
    %14 = arith.maximumf %12, %13 : vector<32x16xf32>
    %15 = arith.truncf %14 : vector<32x16xf32> to vector<32x16xbf16>
    %c0_13 = arith.constant 0 : index
    %c0_14 = arith.constant 0 : index
    %16 = vector.load %arg7[%c0_13, %c0_14] : memref<16x32xbf16, #tpu.memory_space<vmem>>, vector<16x32xbf16>
    %cst_15 = arith.constant dense<0.000000e+00> : vector<32x32xf32>
    %17 = tpu.matmul %15, %16, %cst_15 {dimension_numbers = #tpu.dot_dimension_numbers<[1], [0], [0], [1], [0, 0, 1, 1], [], []>} : vector<32x16xbf16>, vector<16x32xbf16>, vector<32x32xf32> -> vector<32x32xf32>
    %c0_16 = arith.constant 0 : index
    %c0_17 = arith.constant 0 : index
    %18 = vector.load %arg8[%c0_16, %c0_17] : memref<1x32xf32, #tpu.memory_space<vmem>>, vector<1x32xf32>
    %19 = vector.broadcast %18 : vector<1x32xf32> to vector<32x32xf32>
    %20 = arith.mulf %17, %19 : vector<32x32xf32>
    %c0_18 = arith.constant 0 : index
    %c0_19 = arith.constant 0 : index
    %21 = vector.load %arg9[%c0_18, %c0_19] : memref<1x32xf32, #tpu.memory_space<vmem>>, vector<1x32xf32>
    %22 = vector.broadcast %21 : vector<1x32xf32> to vector<32x32xf32>
    %23 = arith.addf %20, %22 : vector<32x32xf32>
    %cst_20 = arith.constant 0.000000e+00 : f32
    %24 = vector.broadcast %cst_20 : f32 to vector<32x32xf32>
    %25 = arith.maximumf %23, %24 : vector<32x32xf32>
    %c0_21 = arith.constant 0 : index
    %c0_22 = arith.constant 0 : index
    %26 = vector.load %arg10[%c0_21, %c0_22] : memref<32x32xf32, #tpu.memory_space<vmem>>, vector<32x32xf32>
    tpu.vector_store %arg10[%c0_21, %c0_22], %25 {strides = array<i32>} : memref<32x32xf32, #tpu.memory_space<vmem>>, vector<32x32xf32>,
    return
  }
  func.func @transform_0(%arg0: i32) -> (i32, i32) {
    %c0_i32 = arith.constant 0 : i32
    %c0_i32_0 = arith.constant 0 : i32
    return %arg0, %c0_i32 : i32, i32
  }
  func.func @transform_1(%arg0: i32) -> (i32, i32) {
    %c0_i32 = arith.constant 0 : i32
    %c0_i32_0 = arith.constant 0 : i32
    return %arg0, %c0_i32 : i32, i32
  }
  func.func @transform_2(%arg0: i32) -> (i32, i32) {
    %c0_i32 = arith.constant 0 : i32
    %c0_i32_0 = arith.constant 0 : i32
    %c0_i32_1 = arith.constant 0 : i32
    return %c0_i32, %c0_i32_0 : i32, i32
  }
  func.func @transform_3(%arg0: i32) -> (i32, i32) {
    %c0_i32 = arith.constant 0 : i32
    %c0_i32_0 = arith.constant 0 : i32
    %c0_i32_1 = arith.constant 0 : i32
    return %c0_i32, %c0_i32_0 : i32, i32
  }
  func.func @transform_4(%arg0: i32) -> (i32, i32) {
    %c0_i32 = arith.constant 0 : i32
    %c0_i32_0 = arith.constant 0 : i32
    %c0_i32_1 = arith.constant 0 : i32
    return %c0_i32, %c0_i32_0 : i32, i32
  }
  func.func @transform_5(%arg0: i32) -> (i32, i32) {
    %c0_i32 = arith.constant 0 : i32
    %c0_i32_0 = arith.constant 0 : i32
    %c0_i32_1 = arith.constant 0 : i32
    return %c0_i32, %c0_i32_0 : i32, i32
  }
  func.func @transform_6(%arg0: i32) -> (i32, i32) {
    %c0_i32 = arith.constant 0 : i32
    %c0_i32_0 = arith.constant 0 : i32
    %c0_i32_1 = arith.constant 0 : i32
    return %c0_i32, %c0_i32_0 : i32, i32
  }
  func.func @transform_7(%arg0: i32) -> (i32, i32) {
    %c0_i32 = arith.constant 0 : i32
    %c0_i32_0 = arith.constant 0 : i32
    %c0_i32_1 = arith.constant 0 : i32
    return %c0_i32, %c0_i32_0 : i32, i32
  }
  func.func @transform_8(%arg0: i32) -> (i32, i32) {
    %c0_i32 = arith.constant 0 : i32
    %c0_i32_0 = arith.constant 0 : i32
    %c0_i32_1 = arith.constant 0 : i32
    return %c0_i32, %c0_i32_0 : i32, i32
  }
  func.func @transform_9(%arg0: i32) -> (i32, i32) {
    %c0_i32 = arith.constant 0 : i32
    %c0_i32_0 = arith.constant 0 : i32
    return %arg0, %c0_i32 : i32, i32
  }
}

</mosaic_0001>

<llo_original>
// kernel: hgstem_forward.4
$region0: #{hgstem_forward.4}
  #allocation0 [shape = 'u32[]', space=smem, size = 0x4, offset = 0x4, fixed_abs, tag = 'smem constant byte address 0x4 - core index']
  #allocation1 [shape = 'u32[144,128]{1,0:T(1,128)}', space=vmem, size = 0x12000, scoped, tag = 'internal scratch']
  %s0 = inlined_call_operand.vmem [shape: bf16[128,27], index: 0, kind: input, shape index: {}]
  %s1 = inlined_call_operand.vmem [shape: bf16[27,16], index: 1, kind: input, shape index: {}]
  %s2 = inlined_call_operand.vmem [shape: f32[1,16], index: 2, kind: input, shape index: {}]
  %s3 = inlined_call_operand.vmem [shape: f32[1,16], index: 3, kind: input, shape index: {}]
  %s4 = inlined_call_operand.vmem [shape: f32[128,16], index: 4, kind: output, shape index: {}]
  %s5 = sld [smem:[#allocation0]]
  $region26: #{hgstem_forward.4} parent=0
    _
  %s7 = ssub.s32 1, %s5
  %s8 = scalar_select 0, %s7, %s5
  // Predicated region
  $region2: #{hgstem_forward.4} parent=0 // pred_check
    _
  $region3: #{hgstem_forward.4} parent=0 // pred_check_branch
    %10 = sbr.rel (0) target = $region5
  $region4: #{hgstem_forward.4} parent=0 // pred_region
    _
  $region5: #{hgstem_forward.4} parent=0 // pred_fallthru
    _
  // Predicated region
  $region6: #{hgstem_forward.4} parent=0 // pred_check
    _
  $region7: #{hgstem_forward.4} parent=0 // pred_check_branch
    %12 = sbr.rel (0) target = $region9
  $region8: #{hgstem_forward.4} parent=0 // pred_region
    _
  $region9: #{hgstem_forward.4} parent=0 // pred_fallthru
    _
  // Predicated region
  $region10: #{hgstem_forward.4} parent=0 // pred_check
    _
  $region11: #{hgstem_forward.4} parent=0 // pred_check_branch
    %14 = sbr.rel (0) target = $region13
  $region12: #{hgstem_forward.4} parent=0 // pred_region
    _
  $region13: #{hgstem_forward.4} parent=0 // pred_fallthru
    _
  // Predicated region
  $region14: #{hgstem_forward.4} parent=0 // pred_check
    _
  $region15: #{hgstem_forward.4} parent=0 // pred_check_branch
    %16 = sbr.rel (0) target = $region17
  $region16: #{hgstem_forward.4} parent=0 // pred_region
    _
  $region17: #{hgstem_forward.4} parent=0 // pred_fallthru
    _
  %v18 = vld [vmem:[%s0] sm:$0xf]
  %v19 = vld [vmem:[%s0 + $0x4] sm:$0xf]
  %v20 = vld [vmem:[%s0 + $0x8] sm:$0xf]
  %v21 = vld [vmem:[%s0 + $0xc] sm:$0xf]
  %v22 = vld [vmem:[%s0 + $0x10] sm:$0xf]
  %v23 = vld [vmem:[%s0 + $0x14] sm:$0xf]
  %v24 = vld [vmem:[%s0 + $0x18] sm:$0xf]
  %v25 = vld [vmem:[%s0 + $0x1c] sm:$0xf]
  %v26 = vld [vmem:[%s0 + $0x20] sm:$0xf]
  %v27 = vld [vmem:[%s0 + $0x24] sm:$0xf]
  %v28 = vld [vmem:[%s0 + $0x28] sm:$0xf]
  %v29 = vld [vmem:[%s0 + $0x2c] sm:$0xf]
  %v30 = vld [vmem:[%s0 + $0x30] sm:$0xf]
  %v31 = vld [vmem:[%s0 + $0x34] sm:$0xf]
  %v32 = vld [vmem:[%s0 + $0x38] sm:$0xf]
  %v33 = vld [vmem:[%s0 + $0x3c] sm:$0xf]
  %v34 = vld [vmem:[%s1] sm:$0xf]
  %v35 = vld [vmem:[%s1 + $0x4] sm:$0xf]
  %v36 = vld [vmem:[%s1 + $0x8] sm:$0xf]
  %v37 = vld [vmem:[%s1 + $0xc] sm:$0x3]
  %v54 = vunpack.c.l.b16 %v18
  %v55 = vunpack.c.l.b16 %v19
  %v56 = vunpack.c.l.b16 %v20
  %v57 = vunpack.c.l.b16 %v21
  %v58 = vunpack.c.l.b16 %v22
  %v59 = vunpack.c.l.b16 %v23
  %v60 = vunpack.c.l.b16 %v24
  %v61 = vunpack.c.l.b16 %v25
  %v62 = vunpack.c.l.b16 %v26
  %v63 = vunpack.c.l.b16 %v27
  %v64 = vunpack.c.l.b16 %v28
  %v65 = vunpack.c.l.b16 %v29
  %v66 = vunpack.c.l.b16 %v30
  %v67 = vunpack.c.l.b16 %v31
  %v68 = vunpack.c.l.b16 %v32
  %v69 = vunpack.c.l.b16 %v33
  %v70 = vpack.c.b16 %v55, %v54
  %v71 = vpack.c.b16 %v57, %v56
  %v72 = vpack.c.b16 %v59, %v58
  %v73 = vpack.c.b16 %v61, %v60
  %v74 = vpack.c.b16 %v63, %v62
  %v75 = vpack.c.b16 %v65, %v64
  %v76 = vpack.c.b16 %v67, %v66
  %v77 = vpack.c.b16 %v69, %v68
  %v82 = vunpack.c.l.b16 %v34
  %v83 = vunpack.c.l.b16 %v35
  %v84 = vunpack.c.l.b16 %v36
  %v85 = vunpack.c.l.b16 %v37
  %v86 = vpack.c.b16 %v83, %v82
  %v87 = vpack.c.b16 %v85, %v84
  %vm89 = vcmask 220160
  %v91 = vsel %vm89, %v70, 0
  %v94 = vsel %vm89, %v71, 0
  %v97 = vsel %vm89, %v72, 0
  %v100 = vsel %vm89, %v73, 0
  %v103 = vsel %vm89, %v74, 0
  %v106 = vsel %vm89, %v75, 0
  %v109 = vsel %vm89, %v76, 0
  %v112 = vsel %vm89, %v77, 0
  %vm114 = vcmask 1044480
  %vm115 = vcmask 1045504
  %v116 = vsel %vm114, 4294967295, 65535
  %v117 = vsel %vm115, %v116, 0
  %v119 = vand.u32 %v87, %v117
  %121 = vmatprep.subr.bf16.mxu0 0
  %122 = vmatpush1.bf16.msra.mxu0 %v86
  %123 = vmatprep.subr.bf16.mxu0 0
  %124 = vmatpush1.bf16.msra.mxu0 %v119
  %125 = vmatprep.subr.bf16.mxu0 0
  %126 = vmatpush1.bf16.msra.mxu0 0
  %127 = vmatprep.subr.bf16.mxu0 0
  %128 = vmatpush1.bf16.msra.mxu0 0
  %129 = vmatprep.subr.bf16.mxu0 0
  %130 = vmatpush1.bf16.msra.mxu0 0
  %131 = vmatprep.subr.bf16.mxu0 0
  %132 = vmatpush1.bf16.msra.mxu0 0
  %133 = vmatprep.subr.bf16.mxu0 0
  %134 = vmatpush1.bf16.msra.mxu0 0
  %135 = vmatprep.subr.bf16.mxu0 0
  %136 = vmatpush1.bf16.msra.mxu0 0
  %137 = vmatprep.subr.bf16.mxu0 0
  %138 = vmatpush1.bf16.msra.mxu0 0
  %139 = vmatprep.subr.bf16.mxu0 0
  %140 = vmatpush1.bf16.msra.mxu0 0
  %141 = vmatprep.subr.bf16.mxu0 0
  %142 = vmatpush1.bf16.msra.mxu0 0
  %143 = vmatprep.subr.bf16.mxu0 0
  %144 = vmatpush1.bf16.msra.mxu0 0
  %145 = vmatprep.subr.bf16.mxu0 0
  %146 = vmatpush1.bf16.msra.mxu0 0
  %147 = vmatprep.subr.bf16.mxu0 0
  %148 = vmatpush1.bf16.msra.mxu0 0
  %149 = vmatprep.subr.bf16.mxu0 0
  %150 = vmatpush1.bf16.msra.mxu0 0
  %151 = vmatprep.subr.bf16.mxu0 0
  %152 = vmatpush1.bf16.msra.mxu0 0
  %153 = vmatprep.mubr.bf16.mxu0 0
  %154 = vmatmul.mubr.bf16.gmra.mrb[0].mxu0 %v91
  %v155 = vpop.f32.mrb[0].mxu0
  %v156 = vadd.f32 0.0, %v155
  %v157 = vpop.f32.mrb[0].mxu0
  %v158 = vpop.f32.mrb[0].mxu0
  %v159 = vadd.f32 0.0, %v158
  %v160 = vpop.f32.mrb[0].mxu0
  %161 = vmatprep.mubr.bf16.mxu0 0
  %162 = vmatmul.mubr.bf16.gmra.mrb[0].mxu0 %v94
  %v163 = vpop.f32.mrb[0].mxu0
  %v164 = vadd.f32 0.0, %v163
  %v165 = vpop.f32.mrb[0].mxu0
  %v166 = vpop.f32.mrb[0].mxu0
  %v167 = vadd.f32 0.0, %v166
  %v168 = vpop.f32.mrb[0].mxu0
  %169 = vmatprep.mubr.bf16.mxu0 0
  %170 = vmatmul.mubr.bf16.gmra.mrb[0].mxu0 %v97
  %v171 = vpop.f32.mrb[0].mxu0
  %v172 = vadd.f32 0.0, %v171
  %v173 = vpop.f32.mrb[0].mxu0
  %v174 = vpop.f32.mrb[0].mxu0
  %v175 = vadd.f32 0.0, %v174
  %v176 = vpop.f32.mrb[0].mxu0
  %177 = vmatprep.mubr.bf16.mxu0 0
  %178 = vmatmul.mubr.bf16.gmra.mrb[0].mxu0 %v100
  %v179 = vpop.f32.mrb[0].mxu0
  %v180 = vadd.f32 0.0, %v179
  %v181 = vpop.f32.mrb[0].mxu0
  %v182 = vpop.f32.mrb[0].mxu0
  %v183 = vadd.f32 0.0, %v182
  %v184 = vpop.f32.mrb[0].mxu0
  %185 = vmatprep.mubr.bf16.mxu0 0
  %186 = vmatmul.mubr.bf16.gmra.mrb[0].mxu0 %v103
  %v187 = vpop.f32.mrb[0].mxu0
  %v188 = vadd.f32 0.0, %v187
  %v189 = vpop.f32.mrb[0].mxu0
  %v190 = vpop.f32.mrb[0].mxu0
  %v191 = vadd.f32 0.0, %v190
  %v192 = vpop.f32.mrb[0].mxu0
  %193 = vmatprep.mubr.bf16.mxu0 0
  %194 = vmatmul.mubr.bf16.gmra.mrb[0].mxu0 %v106
  %v195 = vpop.f32.mrb[0].mxu0
  %v196 = vadd.f32 0.0, %v195
  %v197 = vpop.f32.mrb[0].mxu0
  %v198 = vpop.f32.mrb[0].mxu0
  %v199 = vadd.f32 0.0, %v198
  %v200 = vpop.f32.mrb[0].mxu0
  %201 = vmatprep.mubr.bf16.mxu0 0
  %202 = vmatmul.mubr.bf16.gmra.mrb[0].mxu0 %v109
  %v203 = vpop.f32.mrb[0].mxu0
  %v204 = vadd.f32 0.0, %v203
  %v205 = vpop.f32.mrb[0].mxu0
  %v206 = vpop.f32.mrb[0].mxu0
  %v207 = vadd.f32 0.0, %v206
  %v208 = vpop.f32.mrb[0].mxu0
  %209 = vmatprep.mubr.bf16.mxu0 0
  %210 = vmatmul.mubr.bf16.gmra.mrb[0].mxu0 %v112
  %v211 = vpop.f32.mrb[0].mxu0
  %v212 = vadd.f32 0.0, %v211
  %v213 = vpop.f32.mrb[0].mxu0
  %v214 = vpop.f32.mrb[0].mxu0
  %v215 = vadd.f32 0.0, %v214
  %v216 = vpop.f32.mrb[0].mxu0
  %217 = vdwg.mxu0
  %v218 = vld [vmem:[%s2] sm:$0x1]
  %v220 = vlaneseq
  %v221 = vshrl.u32 %v220, 7
  %v222 = vsub.s32 0, %v221
  %v223 = vrot.slane %v218, %v222
  %v225 = vmul.f32 %v156, %v223
  %v226 = vmul.f32 %v159, %v223
  %v227 = vmul.f32 %v164, %v223
  %v228 = vmul.f32 %v167, %v223
  %v229 = vmul.f32 %v172, %v223
  %v230 = vmul.f32 %v175, %v223
  %v231 = vmul.f32 %v180, %v223
  %v232 = vmul.f32 %v183, %v223
  %v233 = vmul.f32 %v188, %v223
  %v234 = vmul.f32 %v191, %v223
  %v235 = vmul.f32 %v196, %v223
  %v236 = vmul.f32 %v199, %v223
  %v237 = vmul.f32 %v204, %v223
  %v238 = vmul.f32 %v207, %v223
  %v239 = vmul.f32 %v212, %v223
  %v240 = vmul.f32 %v215, %v223
  %v241 = vld [vmem:[%s3] sm:$0x1]
  %v243 = vlaneseq
  %v244 = vshrl.u32 %v243, 7
  %v245 = vsub.s32 0, %v244
  %v246 = vrot.slane %v241, %v245
  %v248 = vadd.f32 %v225, %v246
  %v249 = vadd.f32 %v226, %v246
  %v250 = vadd.f32 %v227, %v246
  %v251 = vadd.f32 %v228, %v246
  %v252 = vadd.f32 %v229, %v246
  %v253 = vadd.f32 %v230, %v246
  %v254 = vadd.f32 %v231, %v246
  %v255 = vadd.f32 %v232, %v246
  %v256 = vadd.f32 %v233, %v246
  %v257 = vadd.f32 %v234, %v246
  %v258 = vadd.f32 %v235, %v246
  %v259 = vadd.f32 %v236, %v246
  %v260 = vadd.f32 %v237, %v246
  %v261 = vadd.f32 %v238, %v246
  %v262 = vadd.f32 %v239, %v246
  %v263 = vadd.f32 %v240, %v246
  %v264 = vmax.f32 %v248, 0.0
  %v265 = vmax.f32 %v249, 0.0
  %v266 = vmax.f32 %v250, 0.0
  %v267 = vmax.f32 %v251, 0.0
  %v268 = vmax.f32 %v252, 0.0
  %v269 = vmax.f32 %v253, 0.0
  %v270 = vmax.f32 %v254, 0.0
  %v271 = vmax.f32 %v255, 0.0
  %v272 = vmax.f32 %v256, 0.0
  %v273 = vmax.f32 %v257, 0.0
  %v274 = vmax.f32 %v258, 0.0
  %v275 = vmax.f32 %v259, 0.0
  %v276 = vmax.f32 %v260, 0.0
  %v277 = vmax.f32 %v261, 0.0
  %v278 = vmax.f32 %v262, 0.0
  %v279 = vmax.f32 %v263, 0.0
  %vm280 = vcmask 130048
  %281 = vst.msk [vmem:[%s4] sm:$0xff] %vm280, %v264
  %282 = vst.msk [vmem:[%s4 + $0x8] sm:$0xff] %vm280, %v265
  %283 = vst.msk [vmem:[%s4 + $0x10] sm:$0xff] %vm280, %v266
  %284 = vst.msk [vmem:[%s4 + $0x18] sm:$0xff] %vm280, %v267
  %285 = vst.msk [vmem:[%s4 + $0x20] sm:$0xff] %vm280, %v268
  %286 = vst.msk [vmem:[%s4 + $0x28] sm:$0xff] %vm280, %v269
  %287 = vst.msk [vmem:[%s4 + $0x30] sm:$0xff] %vm280, %v270
  %288 = vst.msk [vmem:[%s4 + $0x38] sm:$0xff] %vm280, %v271
  %289 = vst.msk [vmem:[%s4 + $0x40] sm:$0xff] %vm280, %v272
  %290 = vst.msk [vmem:[%s4 + $0x48] sm:$0xff] %vm280, %v273
  %291 = vst.msk [vmem:[%s4 + $0x50] sm:$0xff] %vm280, %v274
  %292 = vst.msk [vmem:[%s4 + $0x58] sm:$0xff] %vm280, %v275
  %293 = vst.msk [vmem:[%s4 + $0x60] sm:$0xff] %vm280, %v276
  %294 = vst.msk [vmem:[%s4 + $0x68] sm:$0xff] %vm280, %v277
  %295 = vst.msk [vmem:[%s4 + $0x70] sm:$0xff] %vm280, %v278
  %296 = vst.msk [vmem:[%s4 + $0x78] sm:$0xff] %vm280, %v279
  // Predicated region
  $region18: #{hgstem_forward.4} parent=0 // pred_check
    _
  $region19: #{hgstem_forward.4} parent=0 // pred_check_branch
    %298 = sbr.rel (0) target = $region21
  $region20: #{hgstem_forward.4} parent=0 // pred_region
    _
  $region21: #{hgstem_forward.4} parent=0 // pred_fallthru
    _
  // Predicated region
  $region22: #{hgstem_forward.4} parent=0 // pred_check
    _
  $region23: #{hgstem_forward.4} parent=0 // pred_check_branch
    %300 = sbr.rel (0) target = $region25
  $region24: #{hgstem_forward.4} parent=0 // pred_region
    _
  $region25: #{hgstem_forward.4} parent=0 // pred_fallthru
    _

// kernel: hgstem_forward.5
$region0: #{hgstem_forward.5}
  #allocation0 [shape = 'u32[]', space=smem, size = 0x4, offset = 0x4, fixed_abs, tag = 'smem constant byte address 0x4 - core index']
  #allocation1 [shape = 'u32[144,128]{1,0:T(1,128)}', space=vmem, size = 0x12000, scoped, tag = 'internal scratch']
  %s0 = inlined_call_operand.vmem [shape: f32[128,64], index: 0, kind: input, shape index: {}]
  %s1 = inlined_call_operand.vmem [shape: bf16[64,8], index: 1, kind: input, shape index: {}]
  %s2 = inlined_call_operand.vmem [shape: f32[1,8], index: 2, kind: input, shape index: {}]
  %s3 = inlined_call_operand.vmem [shape: f32[1,8], index: 3, kind: input, shape index: {}]
  %s4 = inlined_call_operand.vmem [shape: f32[128,8], index: 4, kind: output, shape index: {0}]
  %s5 = inlined_call_operand.vmem [shape: f32[128,16], index: 5, kind: output, shape index: {1}]
  %6 = xla_tuple %s4, %s5
  %s7 = sld [smem:[#allocation0]]
  $region34: #{hgstem_forward.5} parent=0
    _
  %s9 = ssub.s32 1, %s7
  %s10 = scalar_select 0, %s9, %s7
  // Predicated region
  $region2: #{hgstem_forward.5} parent=0 // pred_check
    _
  $region3: #{hgstem_forward.5} parent=0 // pred_check_branch
    %12 = sbr.rel (0) target = $region5
  $region4: #{hgstem_forward.5} parent=0 // pred_region
    _
  $region5: #{hgstem_forward.5} parent=0 // pred_fallthru
    _
  // Predicated region
  $region6: #{hgstem_forward.5} parent=0 // pred_check
    _
  $region7: #{hgstem_forward.5} parent=0 // pred_check_branch
    %14 = sbr.rel (0) target = $region9
  $region8: #{hgstem_forward.5} parent=0 // pred_region
    _
  $region9: #{hgstem_forward.5} parent=0 // pred_fallthru
    _
  // Predicated region
  $region10: #{hgstem_forward.5} parent=0 // pred_check
    _
  $region11: #{hgstem_forward.5} parent=0 // pred_check_branch
    %16 = sbr.rel (0) target = $region13
  $region12: #{hgstem_forward.5} parent=0 // pred_region
    _
  $region13: #{hgstem_forward.5} parent=0 // pred_fallthru
    _
  // Predicated region
  $region14: #{hgstem_forward.5} parent=0 // pred_check
    _
  $region15: #{hgstem_forward.5} parent=0 // pred_check_branch
    %18 = sbr.rel (0) target = $region17
  $region16: #{hgstem_forward.5} parent=0 // pred_region
    _
  $region17: #{hgstem_forward.5} parent=0 // pred_fallthru
    _
  %v20 = vld [vmem:[%s0] sm:$0xff]
  %v21 = vld [vmem:[%s0 + $0x8] sm:$0xff]
  %v22 = vld [vmem:[%s0 + $0x10] sm:$0xff]
  %v23 = vld [vmem:[%s0 + $0x18] sm:$0xff]
  %v24 = vld [vmem:[%s0 + $0x20] sm:$0xff]
  %v25 = vld [vmem:[%s0 + $0x28] sm:$0xff]
  %v26 = vld [vmem:[%s0 + $0x30] sm:$0xff]
  %v27 = vld [vmem:[%s0 + $0x38] sm:$0xff]
  %v28 = vld [vmem:[%s0 + $0x40] sm:$0xff]
  %v29 = vld [vmem:[%s0 + $0x48] sm:$0xff]
  %v30 = vld [vmem:[%s0 + $0x50] sm:$0xff]
  %v31 = vld [vmem:[%s0 + $0x58] sm:$0xff]
  %v32 = vld [vmem:[%s0 + $0x60] sm:$0xff]
  %v33 = vld [vmem:[%s0 + $0x68] sm:$0xff]
  %v34 = vld [vmem:[%s0 + $0x70] sm:$0xff]
  %v35 = vld [vmem:[%s0 + $0x78] sm:$0xff]
  %v36 = vpack.c.bf16 %v21, %v20
  %v37 = vpack.c.bf16 %v23, %v22
  %v38 = vpack.c.bf16 %v25, %v24
  %v39 = vpack.c.bf16 %v27, %v26
  %v40 = vpack.c.bf16 %v29, %v28
  %v41 = vpack.c.bf16 %v31, %v30
  %v42 = vpack.c.bf16 %v33, %v32
  %v43 = vpack.c.bf16 %v35, %v34
  %v44 = vld [vmem:[%s1] sm:$0xf]
  %v45 = vld [vmem:[%s1 + $0x4] sm:$0xf]
  %v46 = vld [vmem:[%s1 + $0x8] sm:$0xf]
  %v47 = vld [vmem:[%s1 + $0xc] sm:$0xf]
  %v48 = vld [vmem:[%s1 + $0x10] sm:$0xf]
  %v49 = vld [vmem:[%s1 + $0x14] sm:$0xf]
  %v50 = vld [vmem:[%s1 + $0x18] sm:$0xf]
  %v51 = vld [vmem:[%s1 + $0x1c] sm:$0xf]
  %v60 = vunpack.c.l.b16 %v44
  %v61 = vunpack.c.l.b16 %v45
  %v62 = vunpack.c.l.b16 %v46
  %v63 = vunpack.c.l.b16 %v47
  %v64 = vunpack.c.l.b16 %v48
  %v65 = vunpack.c.l.b16 %v49
  %v66 = vunpack.c.l.b16 %v50
  %v67 = vunpack.c.l.b16 %v51
  %v68 = vpack.c.b16 %v61, %v60
  %v69 = vpack.c.b16 %v63, %v62
  %v70 = vpack.c.b16 %v65, %v64
  %v71 = vpack.c.b16 %v67, %v66
  %vm76 = vcmask 523264
  %v78 = vsel %vm76, %v36, 0
  %v81 = vsel %vm76, %v37, 0
  %v84 = vsel %vm76, %v38, 0
  %v87 = vsel %vm76, %v39, 0
  %v90 = vsel %vm76, %v40, 0
  %v93 = vsel %vm76, %v41, 0
  %v96 = vsel %vm76, %v42, 0
  %v99 = vsel %vm76, %v43, 0
  %101 = vmatprep.subr.bf16.mxu0 0
  %102 = vmatpush1.bf16.msra.mxu0 %v68
  %103 = vmatprep.subr.bf16.mxu0 0
  %104 = vmatpush1.bf16.msra.mxu0 %v69
  %105 = vmatprep.subr.bf16.mxu0 0
  %106 = vmatpush1.bf16.msra.mxu0 %v70
  %107 = vmatprep.subr.bf16.mxu0 0
  %108 = vmatpush1.bf16.msra.mxu0 %v71
  %109 = vmatprep.subr.bf16.mxu0 0
  %110 = vmatpush1.bf16.msra.mxu0 0
  %111 = vmatprep.subr.bf16.mxu0 0
  %112 = vmatpush1.bf16.msra.mxu0 0
  %113 = vmatprep.subr.bf16.mxu0 0
  %114 = vmatpush1.bf16.msra.mxu0 0
  %115 = vmatprep.subr.bf16.mxu0 0
  %116 = vmatpush1.bf16.msra.mxu0 0
  %117 = vmatprep.subr.bf16.mxu0 0
  %118 = vmatpush1.bf16.msra.mxu0 0
  %119 = vmatprep.subr.bf16.mxu0 0
  %120 = vmatpush1.bf16.msra.mxu0 0
  %121 = vmatprep.subr.bf16.mxu0 0
  %122 = vmatpush1.bf16.msra.mxu0 0
  %123 = vmatprep.subr.bf16.mxu0 0
  %124 = vmatpush1.bf16.msra.mxu0 0
  %125 = vmatprep.subr.bf16.mxu0 0
  %126 = vmatpush1.bf16.msra.mxu0 0
  %127 = vmatprep.subr.bf16.mxu0 0
  %128 = vmatpush1.bf16.msra.mxu0 0
  %129 = vmatprep.subr.bf16.mxu0 0
  %130 = vmatpush1.bf16.msra.mxu0 0
  %131 = vmatprep.subr.bf16.mxu0 0
  %132 = vmatpush1.bf16.msra.mxu0 0
  %133 = vmatprep.mubr.bf16.mxu0 0
  %134 = vmatmul.mubr.bf16.gmra.mrb[0].mxu0 %v78
  %v135 = vpop.f32.mrb[0].mxu0
  %v136 = vadd.f32 0.0, %v135
  %v137 = vpop.f32.mrb[0].mxu0
  %v138 = vpop.f32.mrb[0].mxu0
  %v139 = vadd.f32 0.0, %v138
  %v140 = vpop.f32.mrb[0].mxu0
  %141 = vmatprep.mubr.bf16.mxu0 0
  %142 = vmatmul.mubr.bf16.gmra.mrb[0].mxu0 %v81
  %v143 = vpop.f32.mrb[0].mxu0
  %v144 = vadd.f32 0.0, %v143
  %v145 = vpop.f32.mrb[0].mxu0
  %v146 = vpop.f32.mrb[0].mxu0
  %v147 = vadd.f32 0.0, %v146
  %v148 = vpop.f32.mrb[0].mxu0
  %149 = vmatprep.mubr.bf16.mxu0 0
  %150 = vmatmul.mubr.bf16.gmra.mrb[0].mxu0 %v84
  %v151 = vpop.f32.mrb[0].mxu0
  %v152 = vadd.f32 0.0, %v151
  %v153 = vpop.f32.mrb[0].mxu0
  %v154 = vpop.f32.mrb[0].mxu0
  %v155 = vadd.f32 0.0, %v154
  %v156 = vpop.f32.mrb[0].mxu0
  %157 = vmatprep.mubr.bf16.mxu0 0
  %158 = vmatmul.mubr.bf16.gmra.mrb[0].mxu0 %v87
  %v159 = vpop.f32.mrb[0].mxu0
  %v160 = vadd.f32 0.0, %v159
  %v161 = vpop.f32.mrb[0].mxu0
  %v162 = vpop.f32.mrb[0].mxu0
  %v163 = vadd.f32 0.0, %v162
  %v164 = vpop.f32.mrb[0].mxu0
  %165 = vmatprep.mubr.bf16.mxu0 0
  %166 = vmatmul.mubr.bf16.gmra.mrb[0].mxu0 %v90
  %v167 = vpop.f32.mrb[0].mxu0
  %v168 = vadd.f32 0.0, %v167
  %v169 = vpop.f32.mrb[0].mxu0
  %v170 = vpop.f32.mrb[0].mxu0
  %v171 = vadd.f32 0.0, %v170
  %v172 = vpop.f32.mrb[0].mxu0
  %173 = vmatprep.mubr.bf16.mxu0 0
  %174 = vmatmul.mubr.bf16.gmra.mrb[0].mxu0 %v93
  %v175 = vpop.f32.mrb[0].mxu0
  %v176 = vadd.f32 0.0, %v175
  %v177 = vpop.f32.mrb[0].mxu0
  %v178 = vpop.f32.mrb[0].mxu0
  %v179 = vadd.f32 0.0, %v178
  %v180 = vpop.f32.mrb[0].mxu0
  %181 = vmatprep.mubr.bf16.mxu0 0
  %182 = vmatmul.mubr.bf16.gmra.mrb[0].mxu0 %v96
  %v183 = vpop.f32.mrb[0].mxu0
  %v184 = vadd.f32 0.0, %v183
  %v185 = vpop.f32.mrb[0].mxu0
  %v186 = vpop.f32.mrb[0].mxu0
  %v187 = vadd.f32 0.0, %v186
  %v188 = vpop.f32.mrb[0].mxu0
  %189 = vmatprep.mubr.bf16.mxu0 0
  %190 = vmatmul.mubr.bf16.gmra.mrb[0].mxu0 %v99
  %v191 = vpop.f32.mrb[0].mxu0
  %v192 = vadd.f32 0.0, %v191
  %v193 = vpop.f32.mrb[0].mxu0
  %v194 = vpop.f32.mrb[0].mxu0
  %v195 = vadd.f32 0.0, %v194
  %v196 = vpop.f32.mrb[0].mxu0
  %197 = vdwg.mxu0
  %v198 = vld [vmem:[%s2] sm:$0x1]
  %v200 = vlaneseq
  %v201 = vshrl.u32 %v200, 7
  %v202 = vsub.s32 0, %v201
  %v203 = vrot.slane %v198, %v202
  %v205 = vmul.f32 %v136, %v203
  %v206 = vmul.f32 %v139, %v203
  %v207 = vmul.f32 %v144, %v203
  %v208 = vmul.f32 %v147, %v203
  %v209 = vmul.f32 %v152, %v203
  %v210 = vmul.f32 %v155, %v203
  %v211 = vmul.f32 %v160, %v203
  %v212 = vmul.f32 %v163, %v203
  %v213 = vmul.f32 %v168, %v203
  %v214 = vmul.f32 %v171, %v203
  %v215 = vmul.f32 %v176, %v203
  %v216 = vmul.f32 %v179, %v203
  %v217 = vmul.f32 %v184, %v203
  %v218 = vmul.f32 %v187, %v203
  %v219 = vmul.f32 %v192, %v203
  %v220 = vmul.f32 %v195, %v203
  %v221 = vld [vmem:[%s3] sm:$0x1]
  %v223 = vlaneseq
  %v224 = vshrl.u32 %v223, 7
  %v225 = vsub.s32 0, %v224
  %v226 = vrot.slane %v221, %v225
  %v228 = vadd.f32 %v205, %v226
  %v229 = vadd.f32 %v206, %v226
  %v230 = vadd.f32 %v207, %v226
  %v231 = vadd.f32 %v208, %v226
  %v232 = vadd.f32 %v209, %v226
  %v233 = vadd.f32 %v210, %v226
  %v234 = vadd.f32 %v211, %v226
  %v235 = vadd.f32 %v212, %v226
  %v236 = vadd.f32 %v213, %v226
  %v237 = vadd.f32 %v214, %v226
  %v238 = vadd.f32 %v215, %v226
  %v239 = vadd.f32 %v216, %v226
  %v240 = vadd.f32 %v217, %v226
  %v241 = vadd.f32 %v218, %v226
  %v242 = vadd.f32 %v219, %v226
  %v243 = vadd.f32 %v220, %v226
  %v244 = vmax.f32 %v228, 0.0
  %v245 = vmax.f32 %v229, 0.0
  %v246 = vmax.f32 %v230, 0.0
  %v247 = vmax.f32 %v231, 0.0
  %v248 = vmax.f32 %v232, 0.0
  %v249 = vmax.f32 %v233, 0.0
  %v250 = vmax.f32 %v234, 0.0
  %v251 = vmax.f32 %v235, 0.0
  %v252 = vmax.f32 %v236, 0.0
  %v253 = vmax.f32 %v237, 0.0
  %v254 = vmax.f32 %v238, 0.0
  %v255 = vmax.f32 %v239, 0.0
  %v256 = vmax.f32 %v240, 0.0
  %v257 = vmax.f32 %v241, 0.0
  %v258 = vmax.f32 %v242, 0.0
  %v259 = vmax.f32 %v243, 0.0
  %vm260 = vcmask 64512
  %261 = vst.msk [vmem:[%s4] sm:$0xff] %vm260, %v244
  %262 = vst.msk [vmem:[%s4 + $0x8] sm:$0xff] %vm260, %v245
  %263 = vst.msk [vmem:[%s4 + $0x10] sm:$0xff] %vm260, %v246
  %264 = vst.msk [vmem:[%s4 + $0x18] sm:$0xff] %vm260, %v247
  %265 = vst.msk [vmem:[%s4 + $0x20] sm:$0xff] %vm260, %v248
  %266 = vst.msk [vmem:[%s4 + $0x28] sm:$0xff] %vm260, %v249
  %267 = vst.msk [vmem:[%s4 + $0x30] sm:$0xff] %vm260, %v250
  %268 = vst.msk [vmem:[%s4 + $0x38] sm:$0xff] %vm260, %v251
  %269 = vst.msk [vmem:[%s4 + $0x40] sm:$0xff] %vm260, %v252
  %270 = vst.msk [vmem:[%s4 + $0x48] sm:$0xff] %vm260, %v253
  %271 = vst.msk [vmem:[%s4 + $0x50] sm:$0xff] %vm260, %v254
  %272 = vst.msk [vmem:[%s4 + $0x58] sm:$0xff] %vm260, %v255
  %273 = vst.msk [vmem:[%s4 + $0x60] sm:$0xff] %vm260, %v256
  %274 = vst.msk [vmem:[%s4 + $0x68] sm:$0xff] %vm260, %v257
  %275 = vst.msk [vmem:[%s4 + $0x70] sm:$0xff] %vm260, %v258
  %276 = vst.msk [vmem:[%s4 + $0x78] sm:$0xff] %vm260, %v259
  %293 = vrot.lane.b32.xlu0 %v20, 112
  %v294 = vpop.permute.xlu0 %293
  %295 = vrot.lane.b32.xlu0 %v21, 112
  %v296 = vpop.permute.xlu0 %295
  %297 = vrot.lane.b32.xlu0 %v22, 112
  %v298 = vpop.permute.xlu0 %297
  %299 = vrot.lane.b32.xlu0 %v23, 112
  %v300 = vpop.permute.xlu0 %299
  %301 = vrot.lane.b32.xlu0 %v24, 112
  %v302 = vpop.permute.xlu0 %301
  %303 = vrot.lane.b32.xlu0 %v25, 112
  %v304 = vpop.permute.xlu0 %303
  %305 = vrot.lane.b32.xlu0 %v26, 112
  %v306 = vpop.permute.xlu0 %305
  %307 = vrot.lane.b32.xlu0 %v27, 112
  %v308 = vpop.permute.xlu0 %307
  %309 = vrot.lane.b32.xlu0 %v28, 112
  %v310 = vpop.permute.xlu0 %309
  %311 = vrot.lane.b32.xlu0 %v29, 112
  %v312 = vpop.permute.xlu0 %311
  %313 = vrot.lane.b32.xlu0 %v30, 112
  %v314 = vpop.permute.xlu0 %313
  %315 = vrot.lane.b32.xlu0 %v31, 112
  %v316 = vpop.permute.xlu0 %315
  %317 = vrot.lane.b32.xlu0 %v32, 112
  %v318 = vpop.permute.xlu0 %317
  %319 = vrot.lane.b32.xlu0 %v33, 112
  %v320 = vpop.permute.xlu0 %319
  %321 = vrot.lane.b32.xlu0 %v34, 112
  %v322 = vpop.permute.xlu0 %321
  %323 = vrot.lane.b32.xlu0 %v35, 112
  %v324 = vpop.permute.xlu0 %323
  %v341 = vmax.f32 %v20, %v294
  %v342 = vmax.f32 %v21, %v296
  %v343 = vmax.f32 %v22, %v298
  %v344 = vmax.f32 %v23, %v300
  %v345 = vmax.f32 %v24, %v302
  %v346 = vmax.f32 %v25, %v304
  %v347 = vmax.f32 %v26, %v306
  %v348 = vmax.f32 %v27, %v308
  %v349 = vmax.f32 %v28, %v310
  %v350 = vmax.f32 %v29, %v312
  %v351 = vmax.f32 %v30, %v314
  %v352 = vmax.f32 %v31, %v316
  %v353 = vmax.f32 %v32, %v318
  %v354 = vmax.f32 %v33, %v320
  %v355 = vmax.f32 %v34, %v322
  %v356 = vmax.f32 %v35, %v324
  %373 = vrot.lane.b32.xlu0 %v341, 96
  %v374 = vpop.permute.xlu0 %373
  %375 = vrot.lane.b32.xlu0 %v342, 96
  %v376 = vpop.permute.xlu0 %375
  %377 = vrot.lane.b32.xlu0 %v343, 96
  %v378 = vpop.permute.xlu0 %377
  %379 = vrot.lane.b32.xlu0 %v344, 96
  %v380 = vpop.permute.xlu0 %379
  %381 = vrot.lane.b32.xlu0 %v345, 96
  %v382 = vpop.permute.xlu0 %381
  %383 = vrot.lane.b32.xlu0 %v346, 96
  %v384 = vpop.permute.xlu0 %383
  %385 = vrot.lane.b32.xlu0 %v347, 96
  %v386 = vpop.permute.xlu0 %385
  %387 = vrot.lane.b32.xlu0 %v348, 96
  %v388 = vpop.permute.xlu0 %387
  %389 = vrot.lane.b32.xlu0 %v349, 96
  %v390 = vpop.permute.xlu0 %389
  %391 = vrot.lane.b32.xlu0 %v350, 96
  %v392 = vpop.permute.xlu0 %391
  %393 = vrot.lane.b32.xlu0 %v351, 96
  %v394 = vpop.permute.xlu0 %393
  %395 = vrot.lane.b32.xlu0 %v352, 96
  %v396 = vpop.permute.xlu0 %395
  %397 = vrot.lane.b32.xlu0 %v353, 96
  %v398 = vpop.permute.xlu0 %397
  %399 = vrot.lane.b32.xlu0 %v354, 96
  %v400 = vpop.permute.xlu0 %399
  %401 = vrot.lane.b32.xlu0 %v355, 96
  %v402 = vpop.permute.xlu0 %401
  %403 = vrot.lane.b32.xlu0 %v356, 96
  %v404 = vpop.permute.xlu0 %403
  %v421 = vmax.f32 %v341, %v374
  %v422 = vmax.f32 %v342, %v376
  %v423 = vmax.f32 %v343, %v378
  %v424 = vmax.f32 %v344, %v380
  %v425 = vmax.f32 %v345, %v382
  %v426 = vmax.f32 %v346, %v384
  %v427 = vmax.f32 %v347, %v386
  %v428 = vmax.f32 %v348, %v388
  %v429 = vmax.f32 %v349, %v390
  %v430 = vmax.f32 %v350, %v392
  %v431 = vmax.f32 %v351, %v394
  %v432 = vmax.f32 %v352, %v396
  %v433 = vmax.f32 %v353, %v398
  %v434 = vmax.f32 %v354, %v400
  %v435 = vmax.f32 %v355, %v402
  %v436 = vmax.f32 %v356, %v404
  %vm437 = vcmask 130048
  %438 = vst.msk [vmem:[%s5] sm:$0xff] %vm437, %v421
  %439 = vst.msk [vmem:[%s5 + $0x8] sm:$0xff] %vm437, %v422
  %440 = vst.msk [vmem:[%s5 + $0x10] sm:$0xff] %vm437, %v423
  %441 = vst.msk [vmem:[%s5 + $0x18] sm:$0xff] %vm437, %v424
  %442 = vst.msk [vmem:[%s5 + $0x20] sm:$0xff] %vm437, %v425
  %443 = vst.msk [vmem:[%s5 + $0x28] sm:$0xff] %vm437, %v426
  %444 = vst.msk [vmem:[%s5 + $0x30] sm:$0xff] %vm437, %v427
  %445 = vst.msk [vmem:[%s5 + $0x38] sm:$0xff] %vm437, %v428
  %446 = vst.msk [vmem:[%s5 + $0x40] sm:$0xff] %vm437, %v429
  %447 = vst.msk [vmem:[%s5 + $0x48] sm:$0xff] %vm437, %v430
  %448 = vst.msk [vmem:[%s5 + $0x50] sm:$0xff] %vm437, %v431
  %449 = vst.msk [vmem:[%s5 + $0x58] sm:$0xff] %vm437, %v432
  %450 = vst.msk [vmem:[%s5 + $0x60] sm:$0xff] %vm437, %v433
  %451 = vst.msk [vmem:[%s5 + $0x68] sm:$0xff] %vm437, %v434
  %452 = vst.msk [vmem:[%s5 + $0x70] sm:$0xff] %vm437, %v435
  %453 = vst.msk [vmem:[%s5 + $0x78] sm:$0xff] %vm437, %v436
  // Predicated region
  $region18: #{hgstem_forward.5} parent=0 // pred_check
    _
  $region19: #{hgstem_forward.5} parent=0 // pred_check_branch
    %455 = sbr.rel (0) target = $region21
  $region20: #{hgstem_forward.5} parent=0 // pred_region
    _
  $region21: #{hgstem_forward.5} parent=0 // pred_fallthru
    _
  // Predicated region
  $region22: #{hgstem_forward.5} parent=0 // pred_check
    _
  $region23: #{hgstem_forward.5} parent=0 // pred_check_branch
    %457 = sbr.rel (0) target = $region25
  $region24: #{hgstem_forward.5} parent=0 // pred_region
    _
  $region25: #{hgstem_forward.5} parent=0 // pred_fallthru
    _
  // Predicated region
  $region26: #{hgstem_forward.5} parent=0 // pred_check
    _
  $region27: #{hgstem_forward.5} parent=0 // pred_check_branch
    %459 = sbr.rel (0) target = $region29
  $region28: #{hgstem_forward.5} parent=0 // pred_region
    _
  $region29: #{hgstem_forward.5} parent=0 // pred_fallthru
    _
  // Predicated region
  $region30: #{hgstem_forward.5} parent=0 // pred_check
    _
  $region31: #{hgstem_forward.5} parent=0 // pred_check_branch
    %461 = sbr.rel (0) target = $region33
  $region32: #{hgstem_forward.5} parent=0 // pred_region
    _
  $region33: #{hgstem_forward.5} parent=0 // pred_fallthru
    _

// kernel: hgstem_forward.6
$region0: #{hgstem_forward.6}
  #allocation0 [shape = 'u32[]', space=smem, size = 0x4, offset = 0x4, fixed_abs, tag = 'smem constant byte address 0x4 - core index']
  #allocation1 [shape = 'u32[144,128]{1,0:T(1,128)}', space=vmem, size = 0x12000, scoped, tag = 'internal scratch']
  %s0 = inlined_call_operand.vmem [shape: bf16[128,32], index: 0, kind: input, shape index: {}]
  %s1 = inlined_call_operand.vmem [shape: bf16[32,16], index: 1, kind: input, shape index: {}]
  %s2 = inlined_call_operand.vmem [shape: f32[1,16], index: 2, kind: input, shape index: {}]
  %s3 = inlined_call_operand.vmem [shape: f32[1,16], index: 3, kind: input, shape index: {}]
  %s4 = inlined_call_operand.vmem [shape: f32[128,16], index: 4, kind: output, shape index: {}]
  %s5 = sld [smem:[#allocation0]]
  $region26: #{hgstem_forward.6} parent=0
    _
  %s7 = ssub.s32 1, %s5
  %s8 = scalar_select 0, %s7, %s5
  // Predicated region
  $region2: #{hgstem_forward.6} parent=0 // pred_check
    _
  $region3: #{hgstem_forward.6} parent=0 // pred_check_branch
    %10 = sbr.rel (0) target = $region5
  $region4: #{hgstem_forward.6} parent=0 // pred_region
    _
  $region5: #{hgstem_forward.6} parent=0 // pred_fallthru
    _
  // Predicated region
  $region6: #{hgstem_forward.6} parent=0 // pred_check
    _
  $region7: #{hgstem_forward.6} parent=0 // pred_check_branch
    %12 = sbr.rel (0) target = $region9
  $region8: #{hgstem_forward.6} parent=0 // pred_region
    _
  $region9: #{hgstem_forward.6} parent=0 // pred_fallthru
    _
  // Predicated region
  $region10: #{hgstem_forward.6} parent=0 // pred_check
    _
  $region11: #{hgstem_forward.6} parent=0 // pred_check_branch
    %14 = sbr.rel (0) target = $region13
  $region12: #{hgstem_forward.6} parent=0 // pred_region
    _
  $region13: #{hgstem_forward.6} parent=0 // pred_fallthru
    _
  // Predicated region
  $region14: #{hgstem_forward.6} parent=0 // pred_check
    _
  $region15: #{hgstem_forward.6} parent=0 // pred_check_branch
    %16 = sbr.rel (0) target = $region17
  $region16: #{hgstem_forward.6} parent=0 // pred_region
    _
  $region17: #{hgstem_forward.6} parent=0 // pred_fallthru
    _
  %v18 = vld [vmem:[%s0] sm:$0xf]
  %v19 = vld [vmem:[%s0 + $0x4] sm:$0xf]
  %v20 = vld [vmem:[%s0 + $0x8] sm:$0xf]
  %v21 = vld [vmem:[%s0 + $0xc] sm:$0xf]
  %v22 = vld [vmem:[%s0 + $0x10] sm:$0xf]
  %v23 = vld [vmem:[%s0 + $0x14] sm:$0xf]
  %v24 = vld [vmem:[%s0 + $0x18] sm:$0xf]
  %v25 = vld [vmem:[%s0 + $0x1c] sm:$0xf]
  %v26 = vld [vmem:[%s0 + $0x20] sm:$0xf]
  %v27 = vld [vmem:[%s0 + $0x24] sm:$0xf]
  %v28 = vld [vmem:[%s0 + $0x28] sm:$0xf]
  %v29 = vld [vmem:[%s0 + $0x2c] sm:$0xf]
  %v30 = vld [vmem:[%s0 + $0x30] sm:$0xf]
  %v31 = vld [vmem:[%s0 + $0x34] sm:$0xf]
  %v32 = vld [vmem:[%s0 + $0x38] sm:$0xf]
  %v33 = vld [vmem:[%s0 + $0x3c] sm:$0xf]
  %v34 = vld [vmem:[%s1] sm:$0xf]
  %v35 = vld [vmem:[%s1 + $0x4] sm:$0xf]
  %v36 = vld [vmem:[%s1 + $0x8] sm:$0xf]
  %v37 = vld [vmem:[%s1 + $0xc] sm:$0xf]
  %v54 = vunpack.c.l.b16 %v18
  %v55 = vunpack.c.l.b16 %v19
  %v56 = vunpack.c.l.b16 %v20
  %v57 = vunpack.c.l.b16 %v21
  %v58 = vunpack.c.l.b16 %v22
  %v59 = vunpack.c.l.b16 %v23
  %v60 = vunpack.c.l.b16 %v24
  %v61 = vunpack.c.l.b16 %v25
  %v62 = vunpack.c.l.b16 %v26
  %v63 = vunpack.c.l.b16 %v27
  %v64 = vunpack.c.l.b16 %v28
  %v65 = vunpack.c.l.b16 %v29
  %v66 = vunpack.c.l.b16 %v30
  %v67 = vunpack.c.l.b16 %v31
  %v68 = vunpack.c.l.b16 %v32
  %v69 = vunpack.c.l.b16 %v33
  %v70 = vpack.c.b16 %v55, %v54
  %v71 = vpack.c.b16 %v57, %v56
  %v72 = vpack.c.b16 %v59, %v58
  %v73 = vpack.c.b16 %v61, %v60
  %v74 = vpack.c.b16 %v63, %v62
  %v75 = vpack.c.b16 %v65, %v64
  %v76 = vpack.c.b16 %v67, %v66
  %v77 = vpack.c.b16 %v69, %v68
  %v82 = vunpack.c.l.b16 %v34
  %v83 = vunpack.c.l.b16 %v35
  %v84 = vunpack.c.l.b16 %v36
  %v85 = vunpack.c.l.b16 %v37
  %v86 = vpack.c.b16 %v83, %v82
  %v87 = vpack.c.b16 %v85, %v84
  %vm90 = vcmask 261120
  %v92 = vsel %vm90, %v70, 0
  %v95 = vsel %vm90, %v71, 0
  %v98 = vsel %vm90, %v72, 0
  %v101 = vsel %vm90, %v73, 0
  %v104 = vsel %vm90, %v74, 0
  %v107 = vsel %vm90, %v75, 0
  %v110 = vsel %vm90, %v76, 0
  %v113 = vsel %vm90, %v77, 0
  %115 = vmatprep.subr.bf16.mxu0 0
  %116 = vmatpush1.bf16.msra.mxu0 %v86
  %117 = vmatprep.subr.bf16.mxu0 0
  %118 = vmatpush1.bf16.msra.mxu0 %v87
  %119 = vmatprep.subr.bf16.mxu0 0
  %120 = vmatpush1.bf16.msra.mxu0 0
  %121 = vmatprep.subr.bf16.mxu0 0
  %122 = vmatpush1.bf16.msra.mxu0 0
  %123 = vmatprep.subr.bf16.mxu0 0
  %124 = vmatpush1.bf16.msra.mxu0 0
  %125 = vmatprep.subr.bf16.mxu0 0
  %126 = vmatpush1.bf16.msra.mxu0 0
  %127 = vmatprep.subr.bf16.mxu0 0
  %128 = vmatpush1.bf16.msra.mxu0 0
  %129 = vmatprep.subr.bf16.mxu0 0
  %130 = vmatpush1.bf16.msra.mxu0 0
  %131 = vmatprep.subr.bf16.mxu0 0
  %132 = vmatpush1.bf16.msra.mxu0 0
  %133 = vmatprep.subr.bf16.mxu0 0
  %134 = vmatpush1.bf16.msra.mxu0 0
  %135 = vmatprep.subr.bf16.mxu0 0
  %136 = vmatpush1.bf16.msra.mxu0 0
  %137 = vmatprep.subr.bf16.mxu0 0
  %138 = vmatpush1.bf16.msra.mxu0 0
  %139 = vmatprep.subr.bf16.mxu0 0
  %140 = vmatpush1.bf16.msra.mxu0 0
  %141 = vmatprep.subr.bf16.mxu0 0
  %142 = vmatpush1.bf16.msra.mxu0 0
  %143 = vmatprep.subr.bf16.mxu0 0
  %144 = vmatpush1.bf16.msra.mxu0 0
  %145 = vmatprep.subr.bf16.mxu0 0
  %146 = vmatpush1.bf16.msra.mxu0 0
  %147 = vmatprep.mubr.bf16.mxu0 0
  %148 = vmatmul.mubr.bf16.gmra.mrb[0].mxu0 %v92
  %v149 = vpop.f32.mrb[0].mxu0
  %v150 = vadd.f32 0.0, %v149
  %v151 = vpop.f32.mrb[0].mxu0
  %v152 = vpop.f32.mrb[0].mxu0
  %v153 = vadd.f32 0.0, %v152
  %v154 = vpop.f32.mrb[0].mxu0
  %155 = vmatprep.mubr.bf16.mxu0 0
  %156 = vmatmul.mubr.bf16.gmra.mrb[0].mxu0 %v95
  %v157 = vpop.f32.mrb[0].mxu0
  %v158 = vadd.f32 0.0, %v157
  %v159 = vpop.f32.mrb[0].mxu0
  %v160 = vpop.f32.mrb[0].mxu0
  %v161 = vadd.f32 0.0, %v160
  %v162 = vpop.f32.mrb[0].mxu0
  %163 = vmatprep.mubr.bf16.mxu0 0
  %164 = vmatmul.mubr.bf16.gmra.mrb[0].mxu0 %v98
  %v165 = vpop.f32.mrb[0].mxu0
  %v166 = vadd.f32 0.0, %v165
  %v167 = vpop.f32.mrb[0].mxu0
  %v168 = vpop.f32.mrb[0].mxu0
  %v169 = vadd.f32 0.0, %v168
  %v170 = vpop.f32.mrb[0].mxu0
  %171 = vmatprep.mubr.bf16.mxu0 0
  %172 = vmatmul.mubr.bf16.gmra.mrb[0].mxu0 %v101
  %v173 = vpop.f32.mrb[0].mxu0
  %v174 = vadd.f32 0.0, %v173
  %v175 = vpop.f32.mrb[0].mxu0
  %v176 = vpop.f32.mrb[0].mxu0
  %v177 = vadd.f32 0.0, %v176
  %v178 = vpop.f32.mrb[0].mxu0
  %179 = vmatprep.mubr.bf16.mxu0 0
  %180 = vmatmul.mubr.bf16.gmra.mrb[0].mxu0 %v104
  %v181 = vpop.f32.mrb[0].mxu0
  %v182 = vadd.f32 0.0, %v181
  %v183 = vpop.f32.mrb[0].mxu0
  %v184 = vpop.f32.mrb[0].mxu0
  %v185 = vadd.f32 0.0, %v184
  %v186 = vpop.f32.mrb[0].mxu0
  %187 = vmatprep.mubr.bf16.mxu0 0
  %188 = vmatmul.mubr.bf16.gmra.mrb[0].mxu0 %v107
  %v189 = vpop.f32.mrb[0].mxu0
  %v190 = vadd.f32 0.0, %v189
  %v191 = vpop.f32.mrb[0].mxu0
  %v192 = vpop.f32.mrb[0].mxu0
  %v193 = vadd.f32 0.0, %v192
  %v194 = vpop.f32.mrb[0].mxu0
  %195 = vmatprep.mubr.bf16.mxu0 0
  %196 = vmatmul.mubr.bf16.gmra.mrb[0].mxu0 %v110
  %v197 = vpop.f32.mrb[0].mxu0
  %v198 = vadd.f32 0.0, %v197
  %v199 = vpop.f32.mrb[0].mxu0
  %v200 = vpop.f32.mrb[0].mxu0
  %v201 = vadd.f32 0.0, %v200
  %v202 = vpop.f32.mrb[0].mxu0
  %203 = vmatprep.mubr.bf16.mxu0 0
  %204 = vmatmul.mubr.bf16.gmra.mrb[0].mxu0 %v113
  %v205 = vpop.f32.mrb[0].mxu0
  %v206 = vadd.f32 0.0, %v205
  %v207 = vpop.f32.mrb[0].mxu0
  %v208 = vpop.f32.mrb[0].mxu0
  %v209 = vadd.f32 0.0, %v208
  %v210 = vpop.f32.mrb[0].mxu0
  %211 = vdwg.mxu0
  %v212 = vld [vmem:[%s2] sm:$0x1]
  %v214 = vlaneseq
  %v215 = vshrl.u32 %v214, 7
  %v216 = vsub.s32 0, %v215
  %v217 = vrot.slane %v212, %v216
  %v219 = vmul.f32 %v150, %v217
  %v220 = vmul.f32 %v153, %v217
  %v221 = vmul.f32 %v158, %v217
  %v222 = vmul.f32 %v161, %v217
  %v223 = vmul.f32 %v166, %v217
  %v224 = vmul.f32 %v169, %v217
  %v225 = vmul.f32 %v174, %v217
  %v226 = vmul.f32 %v177, %v217
  %v227 = vmul.f32 %v182, %v217
  %v228 = vmul.f32 %v185, %v217
  %v229 = vmul.f32 %v190, %v217
  %v230 = vmul.f32 %v193, %v217
  %v231 = vmul.f32 %v198, %v217
  %v232 = vmul.f32 %v201, %v217
  %v233 = vmul.f32 %v206, %v217
  %v234 = vmul.f32 %v209, %v217
  %v235 = vld [vmem:[%s3] sm:$0x1]
  %v237 = vlaneseq
  %v238 = vshrl.u32 %v237, 7
  %v239 = vsub.s32 0, %v238
  %v240 = vrot.slane %v235, %v239
  %v242 = vadd.f32 %v219, %v240
  %v243 = vadd.f32 %v220, %v240
  %v244 = vadd.f32 %v221, %v240
  %v245 = vadd.f32 %v222, %v240
  %v246 = vadd.f32 %v223, %v240
  %v247 = vadd.f32 %v224, %v240
  %v248 = vadd.f32 %v225, %v240
  %v249 = vadd.f32 %v226, %v240
  %v250 = vadd.f32 %v227, %v240
  %v251 = vadd.f32 %v228, %v240
  %v252 = vadd.f32 %v229, %v240
  %v253 = vadd.f32 %v230, %v240
  %v254 = vadd.f32 %v231, %v240
  %v255 = vadd.f32 %v232, %v240
  %v256 = vadd.f32 %v233, %v240
  %v257 = vadd.f32 %v234, %v240
  %v258 = vmax.f32 %v242, 0.0
  %v259 = vmax.f32 %v243, 0.0
  %v260 = vmax.f32 %v244, 0.0
  %v261 = vmax.f32 %v245, 0.0
  %v262 = vmax.f32 %v246, 0.0
  %v263 = vmax.f32 %v247, 0.0
  %v264 = vmax.f32 %v248, 0.0
  %v265 = vmax.f32 %v249, 0.0
  %v266 = vmax.f32 %v250, 0.0
  %v267 = vmax.f32 %v251, 0.0
  %v268 = vmax.f32 %v252, 0.0
  %v269 = vmax.f32 %v253, 0.0
  %v270 = vmax.f32 %v254, 0.0
  %v271 = vmax.f32 %v255, 0.0
  %v272 = vmax.f32 %v256, 0.0
  %v273 = vmax.f32 %v257, 0.0
  %vm274 = vcmask 130048
  %275 = vst.msk [vmem:[%s4] sm:$0xff] %vm274, %v258
  %276 = vst.msk [vmem:[%s4 + $0x8] sm:$0xff] %vm274, %v259
  %277 = vst.msk [vmem:[%s4 + $0x10] sm:$0xff] %vm274, %v260
  %278 = vst.msk [vmem:[%s4 + $0x18] sm:$0xff] %vm274, %v261
  %279 = vst.msk [vmem:[%s4 + $0x20] sm:$0xff] %vm274, %v262
  %280 = vst.msk [vmem:[%s4 + $0x28] sm:$0xff] %vm274, %v263
  %281 = vst.msk [vmem:[%s4 + $0x30] sm:$0xff] %vm274, %v264
  %282 = vst.msk [vmem:[%s4 + $0x38] sm:$0xff] %vm274, %v265
  %283 = vst.msk [vmem:[%s4 + $0x40] sm:$0xff] %vm274, %v266
  %284 = vst.msk [vmem:[%s4 + $0x48] sm:$0xff] %vm274, %v267
  %285 = vst.msk [vmem:[%s4 + $0x50] sm:$0xff] %vm274, %v268
  %286 = vst.msk [vmem:[%s4 + $0x58] sm:$0xff] %vm274, %v269
  %287 = vst.msk [vmem:[%s4 + $0x60] sm:$0xff] %vm274, %v270
  %288 = vst.msk [vmem:[%s4 + $0x68] sm:$0xff] %vm274, %v271
  %289 = vst.msk [vmem:[%s4 + $0x70] sm:$0xff] %vm274, %v272
  %290 = vst.msk [vmem:[%s4 + $0x78] sm:$0xff] %vm274, %v273
  // Predicated region
  $region18: #{hgstem_forward.6} parent=0 // pred_check
    _
  $region19: #{hgstem_forward.6} parent=0 // pred_check_branch
    %292 = sbr.rel (0) target = $region21
  $region20: #{hgstem_forward.6} parent=0 // pred_region
    _
  $region21: #{hgstem_forward.6} parent=0 // pred_fallthru
    _
  // Predicated region
  $region22: #{hgstem_forward.6} parent=0 // pred_check
    _
  $region23: #{hgstem_forward.6} parent=0 // pred_check_branch
    %294 = sbr.rel (0) target = $region25
  $region24: #{hgstem_forward.6} parent=0 // pred_region
    _
  $region25: #{hgstem_forward.6} parent=0 // pred_fallthru
    _

// kernel: hgstem_forward.7
$region0: #{hgstem_forward.7}
  #allocation0 [shape = 'u32[]', space=smem, size = 0x4, offset = 0x4, fixed_abs, tag = 'smem constant byte address 0x4 - core index']
  #allocation1 [shape = 'u32[144,128]{1,0:T(1,128)}', space=vmem, size = 0x12000, scoped, tag = 'internal scratch']
  %s0 = inlined_call_operand.vmem [shape: bf16[32,144], index: 0, kind: input, shape index: {}]
  %s1 = inlined_call_operand.vmem [shape: bf16[32,144], index: 1, kind: input, shape index: {}]
  %s2 = inlined_call_operand.vmem [shape: bf16[144,16], index: 2, kind: input, shape index: {}]
  %s3 = inlined_call_operand.vmem [shape: bf16[144,16], index: 3, kind: input, shape index: {}]
  %s4 = inlined_call_operand.vmem [shape: f32[1,16], index: 4, kind: input, shape index: {}]
  %s5 = inlined_call_operand.vmem [shape: f32[1,16], index: 5, kind: input, shape index: {}]
  %s6 = inlined_call_operand.vmem [shape: bf16[16,32], index: 6, kind: input, shape index: {}]
  %s7 = inlined_call_operand.vmem [shape: f32[1,32], index: 7, kind: input, shape index: {}]
  %s8 = inlined_call_operand.vmem [shape: f32[1,32], index: 8, kind: input, shape index: {}]
  %s9 = inlined_call_operand.hbm [shape: f32[32,32], index: 9, kind: output, shape index: {}]
  %s10 = sld [smem:[#allocation0]]
  $region46: #{hgstem_forward.7} parent=0
    _
  %s12 = ssub.s32 1, %s10
  %s13 = scalar_select 0, %s12, %s10
  $region1: #{hgstem_forward.7} parent=0
    #allocation2 [shape = 'u8[16384]{0}', space=vmem, size = 0x4000, scoped, tag = 'output window, operand 0, single buffered']
    #allocation3 [shape = 's32[1]{0}', space=sflag, size = 0x4, scoped, tag = 'scoped memory for hgstem_forward.7']
    %14 = vsyncpa [#allocation3], 0
    // Predicated region
    $region2: #{hgstem_forward.7} parent=1 // pred_check
      _
    $region3: #{hgstem_forward.7} parent=1 // pred_check_branch
      %16 = sbr.rel (0) target = $region5
    $region4: #{hgstem_forward.7} parent=1 // pred_region
      _
    $region5: #{hgstem_forward.7} parent=1 // pred_fallthru
      _
    // Predicated region
    $region6: #{hgstem_forward.7} parent=1 // pred_check
      _
    $region7: #{hgstem_forward.7} parent=1 // pred_check_branch
      %18 = sbr.rel (0) target = $region9
    $region8: #{hgstem_forward.7} parent=1 // pred_region
      _
    $region9: #{hgstem_forward.7} parent=1 // pred_fallthru
      _
    // Predicated region
    $region10: #{hgstem_forward.7} parent=1 // pred_check
      _
    $region11: #{hgstem_forward.7} parent=1 // pred_check_branch
      %20 = sbr.rel (0) target = $region13
    $region12: #{hgstem_forward.7} parent=1 // pred_region
      _
    $region13: #{hgstem_forward.7} parent=1 // pred_fallthru
      _
    // Predicated region
    $region14: #{hgstem_forward.7} parent=1 // pred_check
      _
    $region15: #{hgstem_forward.7} parent=1 // pred_check_branch
      %22 = sbr.rel (0) target = $region17
    $region16: #{hgstem_forward.7} parent=1 // pred_region
      _
    $region17: #{hgstem_forward.7} parent=1 // pred_fallthru
      _
    // Predicated region
    $region18: #{hgstem_forward.7} parent=1 // pred_check
      _
    $region19: #{hgstem_forward.7} parent=1 // pred_check_branch
      %24 = sbr.rel (0) target = $region21
    $region20: #{hgstem_forward.7} parent=1 // pred_region
      _
    $region21: #{hgstem_forward.7} parent=1 // pred_fallthru
      _
    // Predicated region
    $region22: #{hgstem_forward.7} parent=1 // pred_check
      _
    $region23: #{hgstem_forward.7} parent=1 // pred_check_branch
      %26 = sbr.rel (0) target = $region25
    $region24: #{hgstem_forward.7} parent=1 // pred_region
      _
    $region25: #{hgstem_forward.7} parent=1 // pred_fallthru
      _
    // Predicated region
    $region26: #{hgstem_forward.7} parent=1 // pred_check
      _
    $region27: #{hgstem_forward.7} parent=1 // pred_check_branch
      %28 = sbr.rel (0) target = $region29
    $region28: #{hgstem_forward.7} parent=1 // pred_region
      _
    $region29: #{hgstem_forward.7} parent=1 // pred_fallthru
      _
    // Predicated region
    $region30: #{hgstem_forward.7} parent=1 // pred_check
      _
    $region31: #{hgstem_forward.7} parent=1 // pred_check_branch
      %30 = sbr.rel (0) target = $region33
    $region32: #{hgstem_forward.7} parent=1 // pred_region
      _
    $region33: #{hgstem_forward.7} parent=1 // pred_fallthru
      _
    // Predicated region
    $region34: #{hgstem_forward.7} parent=1 // pred_check
      _
    $region35: #{hgstem_forward.7} parent=1 // pred_check_branch
      %32 = sbr.rel (0) target = $region37
    $region36: #{hgstem_forward.7} parent=1 // pred_region
      _
    $region37: #{hgstem_forward.7} parent=1 // pred_fallthru
      _
    %v34 = vld [vmem:[%s0] sm:$0xff]
    %v35 = vld [vmem:[%s0 + $0x8] sm:$0xff]
    %v36 = vld [vmem:[%s0 + $0x10] sm:$0xff]
    %v37 = vld [vmem:[%s0 + $0x18] sm:$0xff]
    %v38 = vld [vmem:[%s2] sm:$0xf]
    %v39 = vld [vmem:[%s2 + $0x4] sm:$0xf]
    %v40 = vld [vmem:[%s2 + $0x8] sm:$0xf]
    %v41 = vld [vmem:[%s2 + $0xc] sm:$0xf]
    %v42 = vld [vmem:[%s2 + $0x10] sm:$0xf]
    %v43 = vld [vmem:[%s2 + $0x14] sm:$0xf]
    %v44 = vld [vmem:[%s2 + $0x18] sm:$0xf]
    %v45 = vld [vmem:[%s2 + $0x1c] sm:$0xf]
    %v46 = vld [vmem:[%s2 + $0x20] sm:$0xf]
    %v47 = vld [vmem:[%s2 + $0x24] sm:$0xf]
    %v48 = vld [vmem:[%s2 + $0x28] sm:$0xf]
    %v49 = vld [vmem:[%s2 + $0x2c] sm:$0xf]
    %v50 = vld [vmem:[%s2 + $0x30] sm:$0xf]
    %v51 = vld [vmem:[%s2 + $0x34] sm:$0xf]
    %v52 = vld [vmem:[%s2 + $0x38] sm:$0xf]
    %v53 = vld [vmem:[%s2 + $0x3c] sm:$0xf]
    %v54 = vld [vmem:[%s2 + $0x40] sm:$0xf]
    %v55 = vld [vmem:[%s2 + $0x44] sm:$0xf]
    %v56 = vld [vmem:[%s1] sm:$0xff]
    %v57 = vld [vmem:[%s1 + $0x8] sm:$0xff]
    %v58 = vld [vmem:[%s1 + $0x10] sm:$0xff]
    %v59 = vld [vmem:[%s1 + $0x18] sm:$0xff]
    %v60 = vld [vmem:[%s3] sm:$0xf]
    %v61 = vld [vmem:[%s3 + $0x4] sm:$0xf]
    %v62 = vld [vmem:[%s3 + $0x8] sm:$0xf]
    %v63 = vld [vmem:[%s3 + $0xc] sm:$0xf]
    %v64 = vld [vmem:[%s3 + $0x10] sm:$0xf]
    %v65 = vld [vmem:[%s3 + $0x14] sm:$0xf]
    %v66 = vld [vmem:[%s3 + $0x18] sm:$0xf]
    %v67 = vld [vmem:[%s3 + $0x1c] sm:$0xf]
    %v68 = vld [vmem:[%s3 + $0x20] sm:$0xf]
    %v69 = vld [vmem:[%s3 + $0x24] sm:$0xf]
    %v70 = vld [vmem:[%s3 + $0x28] sm:$0xf]
    %v71 = vld [vmem:[%s3 + $0x2c] sm:$0xf]
    %v72 = vld [vmem:[%s3 + $0x30] sm:$0xf]
    %v73 = vld [vmem:[%s3 + $0x34] sm:$0xf]
    %v74 = vld [vmem:[%s3 + $0x38] sm:$0xf]
    %v75 = vld [vmem:[%s3 + $0x3c] sm:$0xf]
    %v76 = vld [vmem:[%s3 + $0x40] sm:$0xf]
    %v77 = vld [vmem:[%s3 + $0x44] sm:$0xf]
    %v82 = vunpack.c.l.b16 %v56
    %v83 = vunpack.c.h.b16 %v56
    %v84 = vunpack.c.l.b16 %v57
    %v85 = vunpack.c.h.b16 %v57
    %v86 = vunpack.c.l.b16 %v58
    %v87 = vunpack.c.h.b16 %v58
    %v88 = vunpack.c.l.b16 %v59
    %v89 = vunpack.c.h.b16 %v59
    %v90 = vpack.c.b16 %v84, %v82
    %v91 = vpack.c.b16 %v85, %v83
    %v92 = vpack.c.b16 %v88, %v86
    %v93 = vpack.c.b16 %v89, %v87
    %v114 = vunpack.c.l.b16 %v60
    %v115 = vunpack.c.l.b16 %v61
    %v116 = vunpack.c.l.b16 %v62
    %v117 = vunpack.c.l.b16 %v63
    %v118 = vunpack.c.l.b16 %v64
    %v119 = vunpack.c.l.b16 %v65
    %v120 = vunpack.c.l.b16 %v66
    %v121 = vunpack.c.l.b16 %v67
    %v122 = vunpack.c.l.b16 %v68
    %v123 = vunpack.c.l.b16 %v69
    %v124 = vunpack.c.l.b16 %v70
    %v125 = vunpack.c.l.b16 %v71
    %v126 = vunpack.c.l.b16 %v72
    %v127 = vunpack.c.l.b16 %v73
    %v128 = vunpack.c.l.b16 %v74
    %v129 = vunpack.c.l.b16 %v75
    %v130 = vunpack.c.l.b16 %v76
    %v131 = vunpack.c.l.b16 %v77
    %v132 = vpack.c.b16 %v115, %v114
    %v133 = vpack.c.b16 %v117, %v116
    %v134 = vpack.c.b16 %v119, %v118
    %v135 = vpack.c.b16 %v121, %v120
    %v136 = vpack.c.b16 %v123, %v122
    %v137 = vpack.c.b16 %v125, %v124
    %v138 = vpack.c.b16 %v127, %v126
    %v139 = vpack.c.b16 %v129, %v128
    %v140 = vpack.c.b16 %v131, %v130
    %vm150 = vcmask 130048
    %v152 = vsel %vm150, %v91, 0
    %v155 = vsel %vm150, %v93, 0
    %157 = vmatprep.subr.bf16.mxu0 0
    %158 = vmatpush1.bf16.msra.mxu0 %v132
    %159 = vmatprep.subr.bf16.mxu0 0
    %160 = vmatpush1.bf16.msra.mxu0 %v133
    %161 = vmatprep.subr.bf16.mxu0 0
    %162 = vmatpush1.bf16.msra.mxu0 %v134
    %163 = vmatprep.subr.bf16.mxu0 0
    %164 = vmatpush1.bf16.msra.mxu0 %v135
    %165 = vmatprep.subr.bf16.mxu0 0
    %166 = vmatpush1.bf16.msra.mxu0 %v136
    %167 = vmatprep.subr.bf16.mxu0 0
    %168 = vmatpush1.bf16.msra.mxu0 %v137
    %169 = vmatprep.subr.bf16.mxu0 0
    %170 = vmatpush1.bf16.msra.mxu0 %v138
    %171 = vmatprep.subr.bf16.mxu0 0
    %172 = vmatpush1.bf16.msra.mxu0 %v139
    %173 = vmatprep.subr.bf16.mxu0 0
    %174 = vmatpush1.bf16.msra.mxu0 %v140
    %175 = vmatprep.subr.bf16.mxu0 0
    %176 = vmatpush1.bf16.msra.mxu0 0
    %177 = vmatprep.subr.bf16.mxu0 0
    %178 = vmatpush1.bf16.msra.mxu0 0
    %179 = vmatprep.subr.bf16.mxu0 0
    %180 = vmatpush1.bf16.msra.mxu0 0
    %181 = vmatprep.subr.bf16.mxu0 0
    %182 = vmatpush1.bf16.msra.mxu0 0
    %183 = vmatprep.subr.bf16.mxu0 0
    %184 = vmatpush1.bf16.msra.mxu0 0
    %185 = vmatprep.subr.bf16.mxu0 0
    %186 = vmatpush1.bf16.msra.mxu0 0
    %187 = vmatprep.subr.bf16.mxu0 0
    %188 = vmatpush1.bf16.msra.mxu0 0
    %189 = vmatprep.mubr.bf16.mxu0 %v152
    %190 = vmatmul.mubr.bf16.gmra.mrb[0].mxu0 %v90
    %v191 = vpop.f32.mrb[0].mxu0
    %v192 = vadd.f32 0.0, %v191
    %v193 = vpop.f32.mrb[0].mxu0
    %v194 = vpop.f32.mrb[0].mxu0
    %v195 = vadd.f32 0.0, %v194
    %v196 = vpop.f32.mrb[0].mxu0
    %197 = vmatprep.mubr.bf16.mxu0 %v155
    %198 = vmatmul.mubr.bf16.gmra.mrb[0].mxu0 %v92
    %v199 = vpop.f32.mrb[0].mxu0
    %v200 = vadd.f32 0.0, %v199
    %v201 = vpop.f32.mrb[0].mxu0
    %v202 = vpop.f32.mrb[0].mxu0
    %v203 = vadd.f32 0.0, %v202
    %v204 = vpop.f32.mrb[0].mxu0
    %205 = vdwg.mxu0
    %v210 = vunpack.c.l.b16 %v34
    %v211 = vunpack.c.h.b16 %v34
    %v212 = vunpack.c.l.b16 %v35
    %v213 = vunpack.c.h.b16 %v35
    %v214 = vunpack.c.l.b16 %v36
    %v215 = vunpack.c.h.b16 %v36
    %v216 = vunpack.c.l.b16 %v37
    %v217 = vunpack.c.h.b16 %v37
    %v218 = vpack.c.b16 %v212, %v210
    %v219 = vpack.c.b16 %v213, %v211
    %v220 = vpack.c.b16 %v216, %v214
    %v221 = vpack.c.b16 %v217, %v215
    %v242 = vunpack.c.l.b16 %v38
    %v243 = vunpack.c.l.b16 %v39
    %v244 = vunpack.c.l.b16 %v40
    %v245 = vunpack.c.l.b16 %v41
    %v246 = vunpack.c.l.b16 %v42
    %v247 = vunpack.c.l.b16 %v43
    %v248 = vunpack.c.l.b16 %v44
    %v249 = vunpack.c.l.b16 %v45
    %v250 = vunpack.c.l.b16 %v46
    %v251 = vunpack.c.l.b16 %v47
    %v252 = vunpack.c.l.b16 %v48
    %v253 = vunpack.c.l.b16 %v49
    %v254 = vunpack.c.l.b16 %v50
    %v255 = vunpack.c.l.b16 %v51
    %v256 = vunpack.c.l.b16 %v52
    %v257 = vunpack.c.l.b16 %v53
    %v258 = vunpack.c.l.b16 %v54
    %v259 = vunpack.c.l.b16 %v55
    %v260 = vpack.c.b16 %v243, %v242
    %v261 = vpack.c.b16 %v245, %v244
    %v262 = vpack.c.b16 %v247, %v246
    %v263 = vpack.c.b16 %v249, %v248
    %v264 = vpack.c.b16 %v251, %v250
    %v265 = vpack.c.b16 %v253, %v252
    %v266 = vpack.c.b16 %v255, %v254
    %v267 = vpack.c.b16 %v257, %v256
    %v268 = vpack.c.b16 %v259, %v258
    %v279 = vsel %vm150, %v219, 0
    %v282 = vsel %vm150, %v221, 0
    %284 = vmatprep.subr.bf16.mxu0 0
    %285 = vmatpush1.bf16.msra.mxu0 %v260
    %286 = vmatprep.subr.bf16.mxu0 0
    %287 = vmatpush1.bf16.msra.mxu0 %v261
    %288 = vmatprep.subr.bf16.mxu0 0
    %289 = vmatpush1.bf16.msra.mxu0 %v262
    %290 = vmatprep.subr.bf16.mxu0 0
    %291 = vmatpush1.bf16.msra.mxu0 %v263
    %292 = vmatprep.subr.bf16.mxu0 0
    %293 = vmatpush1.bf16.msra.mxu0 %v264
    %294 = vmatprep.subr.bf16.mxu0 0
    %295 = vmatpush1.bf16.msra.mxu0 %v265
    %296 = vmatprep.subr.bf16.mxu0 0
    %297 = vmatpush1.bf16.msra.mxu0 %v266
    %298 = vmatprep.subr.bf16.mxu0 0
    %299 = vmatpush1.bf16.msra.mxu0 %v267
    %300 = vmatprep.subr.bf16.mxu0 0
    %301 = vmatpush1.bf16.msra.mxu0 %v268
    %302 = vmatprep.subr.bf16.mxu0 0
    %303 = vmatpush1.bf16.msra.mxu0 0
    %304 = vmatprep.subr.bf16.mxu0 0
    %305 = vmatpush1.bf16.msra.mxu0 0
    %306 = vmatprep.subr.bf16.mxu0 0
    %307 = vmatpush1.bf16.msra.mxu0 0
    %308 = vmatprep.subr.bf16.mxu0 0
    %309 = vmatpush1.bf16.msra.mxu0 0
    %310 = vmatprep.subr.bf16.mxu0 0
    %311 = vmatpush1.bf16.msra.mxu0 0
    %312 = vmatprep.subr.bf16.mxu0 0
    %313 = vmatpush1.bf16.msra.mxu0 0
    %314 = vmatprep.subr.bf16.mxu0 0
    %315 = vmatpush1.bf16.msra.mxu0 0
    %316 = vmatprep.mubr.bf16.mxu0 %v279
    %317 = vmatmul.mubr.bf16.gmra.mrb[0].mxu0 %v218
    %v318 = vpop.f32.mrb[0].mxu0
    %v319 = vadd.f32 %v192, %v318
    %v320 = vpop.f32.mrb[0].mxu0
    %v321 = vpop.f32.mrb[0].mxu0
    %v322 = vadd.f32 %v195, %v321
    %v323 = vpop.f32.mrb[0].mxu0
    %324 = vmatprep.mubr.bf16.mxu0 %v282
    %325 = vmatmul.mubr.bf16.gmra.mrb[0].mxu0 %v220
    %v326 = vpop.f32.mrb[0].mxu0
    %v327 = vadd.f32 %v200, %v326
    %v328 = vpop.f32.mrb[0].mxu0
    %v329 = vpop.f32.mrb[0].mxu0
    %v330 = vadd.f32 %v203, %v329
    %v331 = vpop.f32.mrb[0].mxu0
    %332 = vdwg.mxu0
    %v333 = vld [vmem:[%s4] sm:$0x1]
    %v335 = vlaneseq
    %v336 = vshrl.u32 %v335, 7
    %v337 = vsub.s32 0, %v336
    %v338 = vrot.slane %v333, %v337
    %v340 = vmul.f32 %v319, %v338
    %v341 = vmul.f32 %v322, %v338
    %v342 = vmul.f32 %v327, %v338
    %v343 = vmul.f32 %v330, %v338
    %v344 = vld [vmem:[%s5] sm:$0x1]
    %v346 = vlaneseq
    %v347 = vshrl.u32 %v346, 7
    %v348 = vsub.s32 0, %v347
    %v349 = vrot.slane %v344, %v348
    %v351 = vadd.f32 %v340, %v349
    %v352 = vadd.f32 %v341, %v349
    %v353 = vadd.f32 %v342, %v349
    %v354 = vadd.f32 %v343, %v349
    %v355 = vmax.f32 %v351, 0.0
    %v356 = vmax.f32 %v352, 0.0
    %v357 = vmax.f32 %v353, 0.0
    %v358 = vmax.f32 %v354, 0.0
    %v359 = vpack.c.bf16 %v356, %v355
    %v360 = vpack.c.bf16 %v358, %v357
    %v361 = vld [vmem:[%s6] sm:$0xf]
    %v362 = vld [vmem:[%s6 + $0x4] sm:$0xf]
    %v365 = vunpack.c.l.b16 %v361
    %v366 = vunpack.c.l.b16 %v362
    %v367 = vpack.c.b16 %v366, %v365
    %v370 = vsel %vm150, %v359, 0
    %v373 = vsel %vm150, %v360, 0
    %375 = vmatprep.subr.bf16.mxu0 0
    %376 = vmatpush1.bf16.msra.mxu0 %v367
    %377 = vmatprep.subr.bf16.mxu0 0
    %378 = vmatpush1.bf16.msra.mxu0 0
    %379 = vmatprep.subr.bf16.mxu0 0
    %380 = vmatpush1.bf16.msra.mxu0 0
    %381 = vmatprep.subr.bf16.mxu0 0
    %382 = vmatpush1.bf16.msra.mxu0 0
    %383 = vmatprep.subr.bf16.mxu0 0
    %384 = vmatpush1.bf16.msra.mxu0 0
    %385 = vmatprep.subr.bf16.mxu0 0
    %386 = vmatpush1.bf16.msra.mxu0 0
    %387 = vmatprep.subr.bf16.mxu0 0
    %388 = vmatpush1.bf16.msra.mxu0 0
    %389 = vmatprep.subr.bf16.mxu0 0
    %390 = vmatpush1.bf16.msra.mxu0 0
    %391 = vmatprep.subr.bf16.mxu0 0
    %392 = vmatpush1.bf16.msra.mxu0 0
    %393 = vmatprep.subr.bf16.mxu0 0
    %394 = vmatpush1.bf16.msra.mxu0 0
    %395 = vmatprep.subr.bf16.mxu0 0
    %396 = vmatpush1.bf16.msra.mxu0 0
    %397 = vmatprep.subr.bf16.mxu0 0
    %398 = vmatpush1.bf16.msra.mxu0 0
    %399 = vmatprep.subr.bf16.mxu0 0
    %400 = vmatpush1.bf16.msra.mxu0 0
    %401 = vmatprep.subr.bf16.mxu0 0
    %402 = vmatpush1.bf16.msra.mxu0 0
    %403 = vmatprep.subr.bf16.mxu0 0
    %404 = vmatpush1.bf16.msra.mxu0 0
    %405 = vmatprep.subr.bf16.mxu0 0
    %406 = vmatpush1.bf16.msra.mxu0 0
    %407 = vmatprep.mubr.bf16.mxu0 0
    %408 = vmatmul.mubr.bf16.gmra.mrb[0].mxu0 %v370
    %v409 = vpop.f32.mrb[0].mxu0
    %v410 = vadd.f32 0.0, %v409
    %v411 = vpop.f32.mrb[0].mxu0
    %v412 = vpop.f32.mrb[0].mxu0
    %v413 = vadd.f32 0.0, %v412
    %v414 = vpop.f32.mrb[0].mxu0
    %415 = vmatprep.mubr.bf16.mxu0 0
    %416 = vmatmul.mubr.bf16.gmra.mrb[0].mxu0 %v373
    %v417 = vpop.f32.mrb[0].mxu0
    %v418 = vadd.f32 0.0, %v417
    %v419 = vpop.f32.mrb[0].mxu0
    %v420 = vpop.f32.mrb[0].mxu0
    %v421 = vadd.f32 0.0, %v420
    %v422 = vpop.f32.mrb[0].mxu0
    %423 = vdwg.mxu0
    %v424 = vld [vmem:[%s7] sm:$0x1]
    %v426 = vlaneseq
    %v427 = vshrl.u32 %v426, 7
    %v428 = vsub.s32 0, %v427
    %v429 = vrot.slane %v424, %v428
    %v431 = vmul.f32 %v410, %v429
    %v432 = vmul.f32 %v413, %v429
    %v433 = vmul.f32 %v418, %v429
    %v434 = vmul.f32 %v421, %v429
    %v435 = vld [vmem:[%s8] sm:$0x1]
    %v437 = vlaneseq
    %v438 = vshrl.u32 %v437, 7
    %v439 = vsub.s32 0, %v438
    %v440 = vrot.slane %v435, %v439
    %v442 = vadd.f32 %v431, %v440
    %v443 = vadd.f32 %v432, %v440
    %v444 = vadd.f32 %v433, %v440
    %v445 = vadd.f32 %v434, %v440
    %v446 = vmax.f32 %v442, 0.0
    %v447 = vmax.f32 %v443, 0.0
    %v448 = vmax.f32 %v444, 0.0
    %v449 = vmax.f32 %v445, 0.0
    %vm450 = vcmask 261120
    %451 = vst.msk [vmem:[#allocation2] sm:$0xff] %vm450, %v446
    %452 = vst.msk [vmem:[#allocation2 + $0x8] sm:$0xff] %vm450, %v447
    %453 = vst.msk [vmem:[#allocation2 + $0x10] sm:$0xff] %vm450, %v448
    %454 = vst.msk [vmem:[#allocation2 + $0x18] sm:$0xff] %vm450, %v449
    // Predicated region
    $region38: #{hgstem_forward.7} parent=1 // pred_check
      _
    $region39: #{hgstem_forward.7} parent=1 // pred_check_branch
      %456 = sbr.rel (0) target = $region41
    $region40: #{hgstem_forward.7} parent=1 // pred_region
      %s458 = ssub.s32 512, 512
      %459 = vsyncadd [#allocation3], %s458
      %s460 = sshll.u32 [#allocation2], 4
      %s461 = int_to_ptr.vmem [resolvable:$true] %s460
      %466 = dma.vmem_to_hbm [thread:$0]  %s461, 512, %s9, [#allocation3], 128, 128, 8
    $region41: #{hgstem_forward.7} parent=1 // pred_fallthru
      _
    // Predicated region
    $region42: #{hgstem_forward.7} parent=1 // pred_check
      _
    $region43: #{hgstem_forward.7} parent=1 // pred_check_branch
      %468 = sbr.rel (0) target = $region45
    $region44: #{hgstem_forward.7} parent=1 // pred_region
      %469 = dma.done [#allocation3], 512
    $region45: #{hgstem_forward.7} parent=1 // pred_fallthru
      _
    %470 = vsyncpa [#allocation3], 1

</llo_original>
